<compile_context>
chip_gen: v6e
topology: v6e:2x2x1
jax: 0.10.0
libtpu: 0.0.40
codegen_flags: <defaults>
</compile_context>

<pallas_src>
import functools

import jax
import jax.numpy as jnp
from jax import lax
from jax.experimental import pallas as pl
from jax.experimental.pallas import tpu as pltpu


# ----------------------------------------------------------------------------
# In-kernel helper: reflect-padded shift along one of the last two axes
# ----------------------------------------------------------------------------
def _reflect_shift(x, shift, axis):
    """out[..., i, ...] = x[..., reflect(i + shift), ...]  (mirror w/o edge)."""
    n = x.shape[axis]
    if shift == 0:
        return x
    parts = []
    if shift < 0:
        for i in range(-shift):                       # left boundary columns
            j = -(i + shift)                          # reflected source index
            parts.append(lax.slice_in_dim(x, j, j + 1, axis=axis))
        parts.append(lax.slice_in_dim(x, 0, n + shift, axis=axis))
    else:
        parts.append(lax.slice_in_dim(x, shift, n, axis=axis))
        for i in range(n - shift, n):                 # right boundary columns
            j = 2 * (n - 1) - (i + shift)
            parts.append(lax.slice_in_dim(x, j, j + 1, axis=axis))
    return jnp.concatenate(parts, axis=axis)


# ----------------------------------------------------------------------------
# Pallas kernels
# ----------------------------------------------------------------------------
def _make_h_strip_kernel(*, K, D, PAD, C, cblk, nc):
    """Stage 1: horizontal (along-W) strip attention on a (1, cblk, H, W) block."""

    def kernel(coef_ref, x_ref, out_ref, mean_ref):
        # coef_ref : SMEM (B*C*nc,)  flat per-(b,c) coeffs [w_0..w_{K-1}, g, id]
        # x_ref    : VMEM (1, cblk, H, W)
        # out_ref  : VMEM (1, cblk, H, W)
        # mean_ref : VMEM (1, cblk, 1, 1)  per-channel mean of out (stage-2 filter)
        b = pl.program_id(0)
        cb = pl.program_id(1)
        x = x_ref[...].astype(jnp.float32)
        taps = [_reflect_shift(x, t * D - PAD, axis=3) for t in range(K)]
        gap = jnp.mean(x, axis=3, keepdims=True)              # (1, cblk, H, 1)
        base0 = (b * C + cb * cblk) * nc
        for c in range(cblk):                                 # static unroll
            base = base0 + c * nc
            acc = coef_ref[base] * taps[0][0, c]
            for t in range(1, K):
                acc = acc + coef_ref[base + t] * taps[t][0, c]
            acc = acc + coef_ref[base + K] * gap[0, c]        # (H,1) -> (H,W)
            acc = acc + coef_ref[base + K + 1] * x[0, c]
            out_ref[0, c] = acc.astype(out_ref.dtype)
            mean_ref[0, c] = jnp.mean(acc, keepdims=True)

    return kernel


def _make_w_strip_kernel(*, K, D, PAD, C, cblk, nc):
    """Stage 2: vertical (along-H) strip attention + final gamma/beta residual."""

    def kernel(coef_ref, y_ref, x_ref, out_ref):
        # coef_ref : SMEM (B*C*nc,)  [w_0..w_{K-1}, g, id, beta]
        # y_ref    : VMEM (1, cblk, H, W)   stage-1 output
        # x_ref    : VMEM (1, cblk, H, W)   original input (final residual)
        b = pl.program_id(0)
        cb = pl.program_id(1)
        y = y_ref[...].astype(jnp.float32)
        x = x_ref[...]
        taps = [_reflect_shift(y, t * D - PAD, axis=2) for t in range(K)]
        gap = jnp.mean(y, axis=2, keepdims=True)              # (1, cblk, 1, W)
        base0 = (b * C + cb * cblk) * nc
        for c in range(cblk):
            base = base0 + c * nc
            acc = coef_ref[base] * taps[0][0, c]
            for t in range(1, K):
                acc = acc + coef_ref[base + t] * taps[t][0, c]
            acc = acc + coef_ref[base + K] * gap[0, c]        # (1,W) -> (H,W)
            acc = acc + coef_ref[base + K + 1] * y[0, c]
            acc = acc + coef_ref[base + K + 2] * x[0, c]
            out_ref[0, c] = acc.astype(out_ref.dtype)

    return kernel


# ----------------------------------------------------------------------------
# Wrapper
# ----------------------------------------------------------------------------
def _pick_cblk(C, H, W, *, max_block_bytes=1 << 20, max_unroll=16):
    """Largest divisor of C such that a (1, Cblk, H, W) f32 block stays small."""
    per_ch = H * W * 4
    cap = max(1, min(max_unroll, max_block_bytes // per_ch))
    best = 1
    for d in range(1, C + 1):
        if C % d == 0 and d <= cap:
            best = d
    return best


def cubic_attention(x, params, *, kernel=3, dilation=1, group=2,
                    interm_dtype=jnp.float32):
    """Forward pass of cubic_attention.  x: (B, C, H, W) float32, NCHW."""
    B, C, H, W = x.shape
    K, D, G = kernel, dilation, group
    assert C % G == 0
    assert K % 2 == 1, "odd strip kernel expected (matches the PyTorch module)"
    pad = D * (K - 1) // 2
    assert pad <= min(H, W) - 1, "reflect pad must be smaller than spatial dims"
    cg = C // G
    f32 = jnp.float32
    x = x.astype(f32)

    cblk = _pick_cblk(C, H, W)
    n_cb = C // cblk

    # Fold group->channel filter sharing into the 1x1-conv weight (row
    # duplication commutes with tanh): expanded row (ch*K + t) is original row
    # ((ch // cg)*K + t), so the kernels see per-channel per-tap weights.
    row = jnp.asarray([(ch // cg) * K + t for ch in range(C) for t in range(K)],
                      dtype=jnp.int32)
    wh_exp = params["conv_h"].reshape(G * K, C)[row].astype(f32)      # (C*K, C)
    ww_exp = params["conv_w"].reshape(G * K, C)[row].astype(f32)      # (C*K, C)

    def bcast(p):                                                     # (C,) -> (B, C)
        return jnp.broadcast_to(p.astype(f32)[None, :], (B, C))

    block4 = pl.BlockSpec((1, cblk, H, W), lambda b, cb: (b, cb, 0, 0))
    mean_spec = pl.BlockSpec((1, cblk, 1, 1), lambda b, cb: (b, cb, 0, 0))
    smem = pl.BlockSpec(memory_space=pltpu.MemorySpace.SMEM)
    cparams = pltpu.CompilerParams(
        dimension_semantics=("parallel", "parallel"),
        vmem_limit_bytes=32 * 1024 * 1024)

    # ---- stage 1: horizontal strip attention --------------------------------
    # Fused epilogue:  out = sum_t (filt*A1)[t]*tap_t + B1*gap + C1*x
    inside_h = params["inside_h"].astype(f32)
    lamb_l_h = params["lamb_l_h"].astype(f32)
    lamb_h_h = params["lamb_h_h"].astype(f32)
    a1 = (inside_h + 1.0) * lamb_l_h

    mean_x = jnp.mean(x, axis=(2, 3))                                 # ap(x), (B, C)
    filt1 = jnp.tanh(mean_x @ wh_exp.T).reshape(B, C, K)
    nc1 = K + 2
    coef1 = jnp.concatenate(
        [filt1 * a1[None, :, None],
         bcast(-inside_h * lamb_l_h)[..., None],
         bcast(lamb_h_h + 1.0)[..., None]], axis=-1).reshape(-1)      # (B*C*nc1,)

    out1, mean1 = pl.pallas_call(
        _make_h_strip_kernel(K=K, D=D, PAD=pad, C=C, cblk=cblk, nc=nc1),
        grid=(B, n_cb),
        in_specs=[smem, block4],
        out_specs=(block4, mean_spec),
        out_shape=(jax.ShapeDtypeStruct((B, C, H, W), interm_dtype),
                   jax.ShapeDtypeStruct((B, C, 1, 1), f32)),
        compiler_params=cparams,
    )(coef1, x)

    # ---- stage 2: vertical strip attention + gamma/beta residual ------------
    # final = sum_t (gamma*filt2*A2)[t]*tap_t(y) + gamma*B2*gap(y) + gamma*C2*y + beta*x
    inside_w = params["inside_w"].astype(f32)
    lamb_l_w = params["lamb_l_w"].astype(f32)
    lamb_h_w = params["lamb_h_w"].astype(f32)
    gamma = params["gamma"].astype(f32)
    beta = params["beta"].astype(f32)
    a2 = (inside_w + 1.0) * lamb_l_w * gamma

    filt2 = jnp.tanh(mean1.reshape(B, C) @ ww_exp.T).reshape(B, C, K)
    nc2 = K + 3
    coef2 = jnp.concatenate(
        [filt2 * a2[None, :, None],
         bcast(-inside_w * lamb_l_w * gamma)[..., None],
         bcast((lamb_h_w + 1.0) * gamma)[..., None],
         bcast(beta)[..., None]], axis=-1).reshape(-1)                # (B*C*nc2,)

    out = pl.pallas_call(
        _make_w_strip_kernel(K=K, D=D, PAD=pad, C=C, cblk=cblk, nc=nc2),
        grid=(B, n_cb),
        in_specs=[smem, block4, block4],
        out_specs=block4,
        out_shape=jax.ShapeDtypeStruct((B, C, H, W), f32),
        compiler_params=cparams,
    )(coef2, out1, x)
    return out


# ----------------------------------------------------------------------------
# Pure-JAX reference (mirrors the PyTorch forward exactly)
# ----------------------------------------------------------------------------
def _strip_att_ref(x, conv_w, inside_all, lamb_l, lamb_h, *, kernel, dilation,
                   group, horizontal):
    B, C, H, W = x.shape
    K, D, G = kernel, dilation, group
    pad = D * (K - 1) // 2
    cg = C // G
    mean = jnp.mean(x, axis=(2, 3))                                   # ap(x)
    filt = jnp.tanh(mean @ conv_w.reshape(G * K, C).T).reshape(B, G, K)
    if horizontal:
        xp = jnp.pad(x, ((0, 0), (0, 0), (0, 0), (pad, pad)), mode="reflect")
        taps = [xp[:, :, :, t * D:t * D + W] for t in range(K)]
        gap = jnp.mean(x, axis=3, keepdims=True)
    else:
        xp = jnp.pad(x, ((0, 0), (0, 0), (pad, pad), (0, 0)), mode="reflect")
        taps = [xp[:, :, t * D:t * D + H, :] for t in range(K)]
        gap = jnp.mean(x, axis=2, keepdims=True)
    out = jnp.zeros_like(x)
    for t in range(K):
        w_t = jnp.repeat(filt[:, :, t], cg, axis=1)                   # (B, C)
        out = out + taps[t] * w_t[:, :, None, None]
    ia = inside_all[None, :, None, None]
    out_low = (out * (ia + 1.0) - ia * gap) * lamb_l[None, :, None, None]
    out_high = x * (lamb_h[None, :, None, None] + 1.0)
    return out_low + out_high


def _cubic_attention_ref(x, p, *, kernel, dilation, group):
    o = _strip_att_ref(x, p["conv_h"], p["inside_h"], p["lamb_l_h"], p["lamb_h_h"],
                       kernel=kernel, dilation=dilation, group=group, horizontal=True)
    o = _strip_att_ref(o, p["conv_w"], p["inside_w"], p["lamb_l_w"], p["lamb_h_w"],
                       kernel=kernel, dilation=dilation, group=group, horizontal=False)
    return p["gamma"][None, :, None, None] * o + x * p["beta"][None, :, None, None]


# ----------------------------------------------------------------------------
if __name__ == "__main__":
    # cubic_attention(dim=4, group=2, dilation=1, kernel=3) on x: (2, 4, 16, 16)
    B, C, H, W = 2, 4, 16, 16
    KERNEL, DILATION, GROUP = 3, 1, 2

    key = jax.random.PRNGKey(0)
    ks = jax.random.split(key, 12)
    x = jax.random.normal(ks[0], (B, C, H, W), dtype=jnp.float32)

    # PyTorch inits (zeros/ones) make the module an identity; use small random
    # values so every term of the forward is exercised by the check.
    def rand(k, shape, scale=0.5):
        return scale * jax.random.normal(k, shape, dtype=jnp.float32)

    params = {
        # Conv2d(dim, group*k, 1, bias=False).weight, (G*K, C, 1, 1) squeezed:
        "conv_h":   rand(ks[1], (GROUP * KERNEL, C)),
        "conv_w":   rand(ks[2], (GROUP * KERNEL, C)),
        "inside_h": rand(ks[3], (C,)),
        "lamb_l_h": rand(ks[4], (C,)),
        "lamb_h_h": rand(ks[5], (C,)),
        "inside_w": rand(ks[6], (C,)),
        "lamb_l_w": rand(ks[7], (C,)),
        "lamb_h_w": rand(ks[8], (C,)),
        "gamma":    rand(ks[9], (C,)),
        "beta":     1.0 + rand(ks[10], (C,)),
    }

    fwd = jax.jit(functools.partial(cubic_attention, kernel=KERNEL,
                                    dilation=DILATION, group=GROUP))
    out = jax.block_until_ready(fwd(x, params))

    ref = _cubic_attention_ref(x, params, kernel=KERNEL, dilation=DILATION,
                               group=GROUP)
    assert out.shape == ref.shape == (B, C, H, W), (out.shape, ref.shape)
    max_err = float(jnp.max(jnp.abs(out - ref)))
    assert jnp.allclose(out, ref, atol=2e-5, rtol=2e-5), max_err

    print("KERNEL_OK")
</pallas_src>

<mosaic_0001>
module attributes {stable_mosaic.version = 11 : i64} {
  func.func @kernel(%arg0: i32, %arg1: i32, %arg2: memref<40xf32, #tpu.memory_space<smem>>, %arg3: memref<1x4x16x16xf32, #tpu.memory_space<vmem>>, %arg4: memref<1x4x16x16xf32, #tpu.memory_space<vmem>>, %arg5: memref<1x4x1x1xf32, #tpu.memory_space<vmem>>) attributes {dimension_semantics = [#tpu.dimension_semantics<parallel>, #tpu.dimension_semantics<parallel>], iteration_bounds = array<i64: 2, 1>, scalar_prefetch = 0 : i64, scratch_operands = 0 : i64, tpu.core_type = #tpu.core_type<tc>, window_params = [{transform_indices = @transform_0, window_bounds = array<i64: 40>}, {transform_indices = @transform_1, window_bounds = array<i64: 1, 4, 16, 16>}, {transform_indices = @transform_2, window_bounds = array<i64: 1, 4, 16, 16>}, {transform_indices = @transform_3, window_bounds = array<i64: 1, 4, 1, 1>}]} {
    %c0 = arith.constant 0 : index
    %c0_0 = arith.constant 0 : index
    %c0_1 = arith.constant 0 : index
    %c0_2 = arith.constant 0 : index
    %0 = vector.load %arg3[%c0, %c0_0, %c0_1, %c0_2] : memref<1x4x16x16xf32, #tpu.memory_space<vmem>>, vector<1x4x16x16xf32>
    %1 = vector.extract_strided_slice %0 {offsets = [0, 0, 0, 1], sizes = [1, 4, 16, 1], strides = [1, 1, 1, 1]} : vector<1x4x16x16xf32> to vector<1x4x16x1xf32>
    %2 = vector.extract_strided_slice %0 {offsets = [0, 0, 0, 0], sizes = [1, 4, 16, 15], strides = [1, 1, 1, 1]} : vector<1x4x16x16xf32> to vector<1x4x16x15xf32>
    %3 = tpu.concatenate %1, %2 in 3 : vector<1x4x16x1xf32>, vector<1x4x16x15xf32> -> vector<1x4x16x16xf32>
    %4 = vector.extract_strided_slice %0 {offsets = [0, 0, 0, 1], sizes = [1, 4, 16, 15], strides = [1, 1, 1, 1]} : vector<1x4x16x16xf32> to vector<1x4x16x15xf32>
    %5 = vector.extract_strided_slice %0 {offsets = [0, 0, 0, 14], sizes = [1, 4, 16, 1], strides = [1, 1, 1, 1]} : vector<1x4x16x16xf32> to vector<1x4x16x1xf32>
    %6 = tpu.concatenate %4, %5 in 3 : vector<1x4x16x15xf32>, vector<1x4x16x1xf32> -> vector<1x4x16x16xf32>
    %cst = arith.constant dense<0.000000e+00> : vector<1x4x16xf32>
    %7 = vector.multi_reduction <add>, %0, %cst [3] : vector<1x4x16x16xf32> to vector<1x4x16xf32>
    %8 = vector.shape_cast %7 : vector<1x4x16xf32> to vector<1x4x16x1xf32>
    %cst_3 = arith.constant 1.600000e+01 : f32
    %9 = vector.broadcast %cst_3 : f32 to vector<1x4x16x1xf32>
    %10 = arith.divf %8, %9 : vector<1x4x16x1xf32>
    %c4_i32 = arith.constant 4 : i32
    %11 = arith.muli %arg0, %c4_i32 : i32
    %c4_i32_4 = arith.constant 4 : i32
    %12 = arith.muli %arg1, %c4_i32_4 : i32
    %13 = arith.addi %11, %12 : i32
    %c5_i32 = arith.constant 5 : i32
    %14 = arith.muli %13, %c5_i32 : i32
    %c0_i32 = arith.constant 0 : i32
    %15 = arith.addi %14, %c0_i32 : i32
    %16 = arith.index_cast %15 : i32 to index
    %17 = memref.load %arg2[%16] : memref<40xf32, #tpu.memory_space<smem>>
    %18 = vector.extract_strided_slice %3 {offsets = [0, 0, 0, 0], sizes = [1, 1, 16, 16], strides = [1, 1, 1, 1]} : vector<1x4x16x16xf32> to vector<1x1x16x16xf32>
    %19 = vector.shape_cast %18 : vector<1x1x16x16xf32> to vector<16x16xf32>
    %20 = vector.broadcast %17 : f32 to vector<16x16xf32>
    %21 = arith.mulf %20, %19 : vector<16x16xf32>
    %c1_i32 = arith.constant 1 : i32
    %22 = arith.addi %15, %c1_i32 : i32
    %23 = arith.index_cast %22 : i32 to index
    %24 = memref.load %arg2[%23] : memref<40xf32, #tpu.memory_space<smem>>
    %25 = vector.extract_strided_slice %0 {offsets = [0, 0, 0, 0], sizes = [1, 1, 16, 16], strides = [1, 1, 1, 1]} : vector<1x4x16x16xf32> to vector<1x1x16x16xf32>
    %26 = vector.shape_cast %25 : vector<1x1x16x16xf32> to vector<16x16xf32>
    %27 = vector.broadcast %24 : f32 to vector<16x16xf32>
    %28 = arith.mulf %27, %26 : vector<16x16xf32>
    %29 = arith.addf %21, %28 : vector<16x16xf32>
    %c2_i32 = arith.constant 2 : i32
    %30 = arith.addi %15, %c2_i32 : i32
    %31 = arith.index_cast %30 : i32 to index
    %32 = memref.load %arg2[%31] : memref<40xf32, #tpu.memory_space<smem>>
    %33 = vector.extract_strided_slice %6 {offsets = [0, 0, 0, 0], sizes = [1, 1, 16, 16], strides = [1, 1, 1, 1]} : vector<1x4x16x16xf32> to vector<1x1x16x16xf32>
    %34 = vector.shape_cast %33 : vector<1x1x16x16xf32> to vector<16x16xf32>
    %35 = vector.broadcast %32 : f32 to vector<16x16xf32>
    %36 = arith.mulf %35, %34 : vector<16x16xf32>
    %37 = arith.addf %29, %36 : vector<16x16xf32>
    %c3_i32 = arith.constant 3 : i32
    %38 = arith.addi %15, %c3_i32 : i32
    %39 = arith.index_cast %38 : i32 to index
    %40 = memref.load %arg2[%39] : memref<40xf32, #tpu.memory_space<smem>>
    %41 = vector.extract_strided_slice %10 {offsets = [0, 0, 0, 0], sizes = [1, 1, 16, 1], strides = [1, 1, 1, 1]} : vector<1x4x16x1xf32> to vector<1x1x16x1xf32>
    %42 = vector.shape_cast %41 : vector<1x1x16x1xf32> to vector<16x1xf32>
    %43 = vector.broadcast %40 : f32 to vector<16x1xf32>
    %44 = arith.mulf %43, %42 : vector<16x1xf32>
    %45 = vector.broadcast %44 : vector<16x1xf32> to vector<16x16xf32>
    %46 = arith.addf %37, %45 : vector<16x16xf32>
    %c3_i32_5 = arith.constant 3 : i32
    %47 = arith.addi %15, %c3_i32_5 : i32
    %c1_i32_6 = arith.constant 1 : i32
    %48 = arith.addi %47, %c1_i32_6 : i32
    %49 = arith.index_cast %48 : i32 to index
    %50 = memref.load %arg2[%49] : memref<40xf32, #tpu.memory_space<smem>>
    %51 = vector.extract_strided_slice %0 {offsets = [0, 0, 0, 0], sizes = [1, 1, 16, 16], strides = [1, 1, 1, 1]} : vector<1x4x16x16xf32> to vector<1x1x16x16xf32>
    %52 = vector.shape_cast %51 : vector<1x1x16x16xf32> to vector<16x16xf32>
    %53 = vector.broadcast %50 : f32 to vector<16x16xf32>
    %54 = arith.mulf %53, %52 : vector<16x16xf32>
    %55 = arith.addf %46, %54 : vector<16x16xf32>
    %c0_7 = arith.constant 0 : index
    %c0_8 = arith.constant 0 : index
    %c0_9 = arith.constant 0 : index
    %c0_10 = arith.constant 0 : index
    %56 = vector.load %arg4[%c0_7, %c0_8, %c0_9, %c0_10] : memref<1x4x16x16xf32, #tpu.memory_space<vmem>>, vector<1x1x16x16xf32>
    %57 = vector.shape_cast %56 : vector<1x1x16x16xf32> to vector<16x16xf32>
    %58 = vector.shape_cast %55 : vector<16x16xf32> to vector<1x1x16x16xf32>
    tpu.vector_store %arg4[%c0_7, %c0_8, %c0_9, %c0_10], %58 {strides = array<i32>} : memref<1x4x16x16xf32, #tpu.memory_space<vmem>>, vector<1x1x16x16xf32>,
    %59 = vector.shape_cast %55 : vector<16x16xf32> to vector<1x16x16xf32>
    %cst_11 = arith.constant dense<0.000000e+00> : vector<1xf32>
    %60 = vector.multi_reduction <add>, %59, %cst_11 [1, 2] : vector<1x16x16xf32> to vector<1xf32>
    %61 = vector.shape_cast %60 : vector<1xf32> to vector<1x1x1xf32>
    %62 = vector.extract %61[0, 0, 0] : f32 from vector<1x1x1xf32>
    %63 = vector.broadcast %62 : f32 to vector<1x1xf32>
    %cst_12 = arith.constant 2.560000e+02 : f32
    %64 = vector.broadcast %cst_12 : f32 to vector<1x1xf32>
    %65 = arith.divf %63, %64 : vector<1x1xf32>
    %c0_13 = arith.constant 0 : index
    %c0_14 = arith.constant 0 : index
    %c0_15 = arith.constant 0 : index
    %c0_16 = arith.constant 0 : index
    %66 = vector.load %arg5[%c0_13, %c0_14, %c0_15, %c0_16] : memref<1x4x1x1xf32, #tpu.memory_space<vmem>>, vector<1x1x1x1xf32>
    %67 = vector.shape_cast %66 : vector<1x1x1x1xf32> to vector<1x1xf32>
    %68 = vector.shape_cast %65 : vector<1x1xf32> to vector<1x1x1x1xf32>
    tpu.vector_store %arg5[%c0_13, %c0_14, %c0_15, %c0_16], %68 {strides = array<i32>} : memref<1x4x1x1xf32, #tpu.memory_space<vmem>>, vector<1x1x1x1xf32>,
    %c5_i32_17 = arith.constant 5 : i32
    %69 = arith.addi %14, %c5_i32_17 : i32
    %70 = arith.index_cast %69 : i32 to index
    %71 = memref.load %arg2[%70] : memref<40xf32, #tpu.memory_space<smem>>
    %72 = vector.extract_strided_slice %3 {offsets = [0, 1, 0, 0], sizes = [1, 1, 16, 16], strides = [1, 1, 1, 1]} : vector<1x4x16x16xf32> to vector<1x1x16x16xf32>
    %73 = vector.shape_cast %72 : vector<1x1x16x16xf32> to vector<16x16xf32>
    %74 = vector.broadcast %71 : f32 to vector<16x16xf32>
    %75 = arith.mulf %74, %73 : vector<16x16xf32>
    %c1_i32_18 = arith.constant 1 : i32
    %76 = arith.addi %69, %c1_i32_18 : i32
    %77 = arith.index_cast %76 : i32 to index
    %78 = memref.load %arg2[%77] : memref<40xf32, #tpu.memory_space<smem>>
    %79 = vector.extract_strided_slice %0 {offsets = [0, 1, 0, 0], sizes = [1, 1, 16, 16], strides = [1, 1, 1, 1]} : vector<1x4x16x16xf32> to vector<1x1x16x16xf32>
    %80 = vector.shape_cast %79 : vector<1x1x16x16xf32> to vector<16x16xf32>
    %81 = vector.broadcast %78 : f32 to vector<16x16xf32>
    %82 = arith.mulf %81, %80 : vector<16x16xf32>
    %83 = arith.addf %75, %82 : vector<16x16xf32>
    %c2_i32_19 = arith.constant 2 : i32
    %84 = arith.addi %69, %c2_i32_19 : i32
    %85 = arith.index_cast %84 : i32 to index
    %86 = memref.load %arg2[%85] : memref<40xf32, #tpu.memory_space<smem>>
    %87 = vector.extract_strided_slice %6 {offsets = [0, 1, 0, 0], sizes = [1, 1, 16, 16], strides = [1, 1, 1, 1]} : vector<1x4x16x16xf32> to vector<1x1x16x16xf32>
    %88 = vector.shape_cast %87 : vector<1x1x16x16xf32> to vector<16x16xf32>
    %89 = vector.broadcast %86 : f32 to vector<16x16xf32>
    %90 = arith.mulf %89, %88 : vector<16x16xf32>
    %91 = arith.addf %83, %90 : vector<16x16xf32>
    %c3_i32_20 = arith.constant 3 : i32
    %92 = arith.addi %69, %c3_i32_20 : i32
    %93 = arith.index_cast %92 : i32 to index
    %94 = memref.load %arg2[%93] : memref<40xf32, #tpu.memory_space<smem>>
    %95 = vector.extract_strided_slice %10 {offsets = [0, 1, 0, 0], sizes = [1, 1, 16, 1], strides = [1, 1, 1, 1]} : vector<1x4x16x1xf32> to vector<1x1x16x1xf32>
    %96 = vector.shape_cast %95 : vector<1x1x16x1xf32> to vector<16x1xf32>
    %97 = vector.broadcast %94 : f32 to vector<16x1xf32>
    %98 = arith.mulf %97, %96 : vector<16x1xf32>
    %99 = vector.broadcast %98 : vector<16x1xf32> to vector<16x16xf32>
    %100 = arith.addf %91, %99 : vector<16x16xf32>
    %c3_i32_21 = arith.constant 3 : i32
    %101 = arith.addi %69, %c3_i32_21 : i32
    %c1_i32_22 = arith.constant 1 : i32
    %102 = arith.addi %101, %c1_i32_22 : i32
    %103 = arith.index_cast %102 : i32 to index
    %104 = memref.load %arg2[%103] : memref<40xf32, #tpu.memory_space<smem>>
    %105 = vector.extract_strided_slice %0 {offsets = [0, 1, 0, 0], sizes = [1, 1, 16, 16], strides = [1, 1, 1, 1]} : vector<1x4x16x16xf32> to vector<1x1x16x16xf32>
    %106 = vector.shape_cast %105 : vector<1x1x16x16xf32> to vector<16x16xf32>
    %107 = vector.broadcast %104 : f32 to vector<16x16xf32>
    %108 = arith.mulf %107, %106 : vector<16x16xf32>
    %109 = arith.addf %100, %108 : vector<16x16xf32>
    %c0_23 = arith.constant 0 : index
    %c1 = arith.constant 1 : index
    %c0_24 = arith.constant 0 : index
    %c0_25 = arith.constant 0 : index
    %110 = vector.load %arg4[%c0_23, %c1, %c0_24, %c0_25] : memref<1x4x16x16xf32, #tpu.memory_space<vmem>>, vector<1x1x16x16xf32>
    %111 = vector.shape_cast %110 : vector<1x1x16x16xf32> to vector<16x16xf32>
    %112 = vector.shape_cast %109 : vector<16x16xf32> to vector<1x1x16x16xf32>
    tpu.vector_store %arg4[%c0_23, %c1, %c0_24, %c0_25], %112 {strides = array<i32>} : memref<1x4x16x16xf32, #tpu.memory_space<vmem>>, vector<1x1x16x16xf32>,
    %113 = vector.shape_cast %109 : vector<16x16xf32> to vector<1x16x16xf32>
    %cst_26 = arith.constant dense<0.000000e+00> : vector<1xf32>
    %114 = vector.multi_reduction <add>, %113, %cst_26 [1, 2] : vector<1x16x16xf32> to vector<1xf32>
    %115 = vector.shape_cast %114 : vector<1xf32> to vector<1x1x1xf32>
    %116 = vector.extract %115[0, 0, 0] : f32 from vector<1x1x1xf32>
    %117 = vector.broadcast %116 : f32 to vector<1x1xf32>
    %cst_27 = arith.constant 2.560000e+02 : f32
    %118 = vector.broadcast %cst_27 : f32 to vector<1x1xf32>
    %119 = arith.divf %117, %118 : vector<1x1xf32>
    %c0_28 = arith.constant 0 : index
    %c1_29 = arith.constant 1 : index
    %c0_30 = arith.constant 0 : index
    %c0_31 = arith.constant 0 : index
    %120 = vector.load %arg5[%c0_28, %c1_29, %c0_30, %c0_31] : memref<1x4x1x1xf32, #tpu.memory_space<vmem>>, vector<1x1x1x1xf32>
    %121 = vector.shape_cast %120 : vector<1x1x1x1xf32> to vector<1x1xf32>
    %122 = vector.shape_cast %119 : vector<1x1xf32> to vector<1x1x1x1xf32>
    tpu.vector_store %arg5[%c0_28, %c1_29, %c0_30, %c0_31], %122 {strides = array<i32>} : memref<1x4x1x1xf32, #tpu.memory_space<vmem>>, vector<1x1x1x1xf32>,
    %c10_i32 = arith.constant 10 : i32
    %123 = arith.addi %14, %c10_i32 : i32
    %124 = arith.index_cast %123 : i32 to index
    %125 = memref.load %arg2[%124] : memref<40xf32, #tpu.memory_space<smem>>
    %126 = vector.extract_strided_slice %3 {offsets = [0, 2, 0, 0], sizes = [1, 1, 16, 16], strides = [1, 1, 1, 1]} : vector<1x4x16x16xf32> to vector<1x1x16x16xf32>
    %127 = vector.shape_cast %126 : vector<1x1x16x16xf32> to vector<16x16xf32>
    %128 = vector.broadcast %125 : f32 to vector<16x16xf32>
    %129 = arith.mulf %128, %127 : vector<16x16xf32>
    %c1_i32_32 = arith.constant 1 : i32
    %130 = arith.addi %123, %c1_i32_32 : i32
    %131 = arith.index_cast %130 : i32 to index
    %132 = memref.load %arg2[%131] : memref<40xf32, #tpu.memory_space<smem>>
    %133 = vector.extract_strided_slice %0 {offsets = [0, 2, 0, 0], sizes = [1, 1, 16, 16], strides = [1, 1, 1, 1]} : vector<1x4x16x16xf32> to vector<1x1x16x16xf32>
    %134 = vector.shape_cast %133 : vector<1x1x16x16xf32> to vector<16x16xf32>
    %135 = vector.broadcast %132 : f32 to vector<16x16xf32>
    %136 = arith.mulf %135, %134 : vector<16x16xf32>
    %137 = arith.addf %129, %136 : vector<16x16xf32>
    %c2_i32_33 = arith.constant 2 : i32
    %138 = arith.addi %123, %c2_i32_33 : i32
    %139 = arith.index_cast %138 : i32 to index
    %140 = memref.load %arg2[%139] : memref<40xf32, #tpu.memory_space<smem>>
    %141 = vector.extract_strided_slice %6 {offsets = [0, 2, 0, 0], sizes = [1, 1, 16, 16], strides = [1, 1, 1, 1]} : vector<1x4x16x16xf32> to vector<1x1x16x16xf32>
    %142 = vector.shape_cast %141 : vector<1x1x16x16xf32> to vector<16x16xf32>
    %143 = vector.broadcast %140 : f32 to vector<16x16xf32>
    %144 = arith.mulf %143, %142 : vector<16x16xf32>
    %145 = arith.addf %137, %144 : vector<16x16xf32>
    %c3_i32_34 = arith.constant 3 : i32
    %146 = arith.addi %123, %c3_i32_34 : i32
    %147 = arith.index_cast %146 : i32 to index
    %148 = memref.load %arg2[%147] : memref<40xf32, #tpu.memory_space<smem>>
    %149 = vector.extract_strided_slice %10 {offsets = [0, 2, 0, 0], sizes = [1, 1, 16, 1], strides = [1, 1, 1, 1]} : vector<1x4x16x1xf32> to vector<1x1x16x1xf32>
    %150 = vector.shape_cast %149 : vector<1x1x16x1xf32> to vector<16x1xf32>
    %151 = vector.broadcast %148 : f32 to vector<16x1xf32>
    %152 = arith.mulf %151, %150 : vector<16x1xf32>
    %153 = vector.broadcast %152 : vector<16x1xf32> to vector<16x16xf32>
    %154 = arith.addf %145, %153 : vector<16x16xf32>
    %c3_i32_35 = arith.constant 3 : i32
    %155 = arith.addi %123, %c3_i32_35 : i32
    %c1_i32_36 = arith.constant 1 : i32
    %156 = arith.addi %155, %c1_i32_36 : i32
    %157 = arith.index_cast %156 : i32 to index
    %158 = memref.load %arg2[%157] : memref<40xf32, #tpu.memory_space<smem>>
    %159 = vector.extract_strided_slice %0 {offsets = [0, 2, 0, 0], sizes = [1, 1, 16, 16], strides = [1, 1, 1, 1]} : vector<1x4x16x16xf32> to vector<1x1x16x16xf32>
    %160 = vector.shape_cast %159 : vector<1x1x16x16xf32> to vector<16x16xf32>
    %161 = vector.broadcast %158 : f32 to vector<16x16xf32>
    %162 = arith.mulf %161, %160 : vector<16x16xf32>
    %163 = arith.addf %154, %162 : vector<16x16xf32>
    %c0_37 = arith.constant 0 : index
    %c2 = arith.constant 2 : index
    %c0_38 = arith.constant 0 : index
    %c0_39 = arith.constant 0 : index
    %164 = vector.load %arg4[%c0_37, %c2, %c0_38, %c0_39] : memref<1x4x16x16xf32, #tpu.memory_space<vmem>>, vector<1x1x16x16xf32>
    %165 = vector.shape_cast %164 : vector<1x1x16x16xf32> to vector<16x16xf32>
    %166 = vector.shape_cast %163 : vector<16x16xf32> to vector<1x1x16x16xf32>
    tpu.vector_store %arg4[%c0_37, %c2, %c0_38, %c0_39], %166 {strides = array<i32>} : memref<1x4x16x16xf32, #tpu.memory_space<vmem>>, vector<1x1x16x16xf32>,
    %167 = vector.shape_cast %163 : vector<16x16xf32> to vector<1x16x16xf32>
    %cst_40 = arith.constant dense<0.000000e+00> : vector<1xf32>
    %168 = vector.multi_reduction <add>, %167, %cst_40 [1, 2] : vector<1x16x16xf32> to vector<1xf32>
    %169 = vector.shape_cast %168 : vector<1xf32> to vector<1x1x1xf32>
    %170 = vector.extract %169[0, 0, 0] : f32 from vector<1x1x1xf32>
    %171 = vector.broadcast %170 : f32 to vector<1x1xf32>
    %cst_41 = arith.constant 2.560000e+02 : f32
    %172 = vector.broadcast %cst_41 : f32 to vector<1x1xf32>
    %173 = arith.divf %171, %172 : vector<1x1xf32>
    %c0_42 = arith.constant 0 : index
    %c2_43 = arith.constant 2 : index
    %c0_44 = arith.constant 0 : index
    %c0_45 = arith.constant 0 : index
    %174 = vector.load %arg5[%c0_42, %c2_43, %c0_44, %c0_45] : memref<1x4x1x1xf32, #tpu.memory_space<vmem>>, vector<1x1x1x1xf32>
    %175 = vector.shape_cast %174 : vector<1x1x1x1xf32> to vector<1x1xf32>
    %176 = vector.shape_cast %173 : vector<1x1xf32> to vector<1x1x1x1xf32>
    tpu.vector_store %arg5[%c0_42, %c2_43, %c0_44, %c0_45], %176 {strides = array<i32>} : memref<1x4x1x1xf32, #tpu.memory_space<vmem>>, vector<1x1x1x1xf32>,
    %c15_i32 = arith.constant 15 : i32
    %177 = arith.addi %14, %c15_i32 : i32
    %178 = arith.index_cast %177 : i32 to index
    %179 = memref.load %arg2[%178] : memref<40xf32, #tpu.memory_space<smem>>
    %180 = vector.extract_strided_slice %3 {offsets = [0, 3, 0, 0], sizes = [1, 1, 16, 16], strides = [1, 1, 1, 1]} : vector<1x4x16x16xf32> to vector<1x1x16x16xf32>
    %181 = vector.shape_cast %180 : vector<1x1x16x16xf32> to vector<16x16xf32>
    %182 = vector.broadcast %179 : f32 to vector<16x16xf32>
    %183 = arith.mulf %182, %181 : vector<16x16xf32>
    %c1_i32_46 = arith.constant 1 : i32
    %184 = arith.addi %177, %c1_i32_46 : i32
    %185 = arith.index_cast %184 : i32 to index
    %186 = memref.load %arg2[%185] : memref<40xf32, #tpu.memory_space<smem>>
    %187 = vector.extract_strided_slice %0 {offsets = [0, 3, 0, 0], sizes = [1, 1, 16, 16], strides = [1, 1, 1, 1]} : vector<1x4x16x16xf32> to vector<1x1x16x16xf32>
    %188 = vector.shape_cast %187 : vector<1x1x16x16xf32> to vector<16x16xf32>
    %189 = vector.broadcast %186 : f32 to vector<16x16xf32>
    %190 = arith.mulf %189, %188 : vector<16x16xf32>
    %191 = arith.addf %183, %190 : vector<16x16xf32>
    %c2_i32_47 = arith.constant 2 : i32
    %192 = arith.addi %177, %c2_i32_47 : i32
    %193 = arith.index_cast %192 : i32 to index
    %194 = memref.load %arg2[%193] : memref<40xf32, #tpu.memory_space<smem>>
    %195 = vector.extract_strided_slice %6 {offsets = [0, 3, 0, 0], sizes = [1, 1, 16, 16], strides = [1, 1, 1, 1]} : vector<1x4x16x16xf32> to vector<1x1x16x16xf32>
    %196 = vector.shape_cast %195 : vector<1x1x16x16xf32> to vector<16x16xf32>
    %197 = vector.broadcast %194 : f32 to vector<16x16xf32>
    %198 = arith.mulf %197, %196 : vector<16x16xf32>
    %199 = arith.addf %191, %198 : vector<16x16xf32>
    %c3_i32_48 = arith.constant 3 : i32
    %200 = arith.addi %177, %c3_i32_48 : i32
    %201 = arith.index_cast %200 : i32 to index
    %202 = memref.load %arg2[%201] : memref<40xf32, #tpu.memory_space<smem>>
    %203 = vector.extract_strided_slice %10 {offsets = [0, 3, 0, 0], sizes = [1, 1, 16, 1], strides = [1, 1, 1, 1]} : vector<1x4x16x1xf32> to vector<1x1x16x1xf32>
    %204 = vector.shape_cast %203 : vector<1x1x16x1xf32> to vector<16x1xf32>
    %205 = vector.broadcast %202 : f32 to vector<16x1xf32>
    %206 = arith.mulf %205, %204 : vector<16x1xf32>
    %207 = vector.broadcast %206 : vector<16x1xf32> to vector<16x16xf32>
    %208 = arith.addf %199, %207 : vector<16x16xf32>
    %c3_i32_49 = arith.constant 3 : i32
    %209 = arith.addi %177, %c3_i32_49 : i32
    %c1_i32_50 = arith.constant 1 : i32
    %210 = arith.addi %209, %c1_i32_50 : i32
    %211 = arith.index_cast %210 : i32 to index
    %212 = memref.load %arg2[%211] : memref<40xf32, #tpu.memory_space<smem>>
    %213 = vector.extract_strided_slice %0 {offsets = [0, 3, 0, 0], sizes = [1, 1, 16, 16], strides = [1, 1, 1, 1]} : vector<1x4x16x16xf32> to vector<1x1x16x16xf32>
    %214 = vector.shape_cast %213 : vector<1x1x16x16xf32> to vector<16x16xf32>
    %215 = vector.broadcast %212 : f32 to vector<16x16xf32>
    %216 = arith.mulf %215, %214 : vector<16x16xf32>
    %217 = arith.addf %208, %216 : vector<16x16xf32>
    %c0_51 = arith.constant 0 : index
    %c3 = arith.constant 3 : index
    %c0_52 = arith.constant 0 : index
    %c0_53 = arith.constant 0 : index
    %218 = vector.load %arg4[%c0_51, %c3, %c0_52, %c0_53] : memref<1x4x16x16xf32, #tpu.memory_space<vmem>>, vector<1x1x16x16xf32>
    %219 = vector.shape_cast %218 : vector<1x1x16x16xf32> to vector<16x16xf32>
    %220 = vector.shape_cast %217 : vector<16x16xf32> to vector<1x1x16x16xf32>
    tpu.vector_store %arg4[%c0_51, %c3, %c0_52, %c0_53], %220 {strides = array<i32>} : memref<1x4x16x16xf32, #tpu.memory_space<vmem>>, vector<1x1x16x16xf32>,
    %221 = vector.shape_cast %217 : vector<16x16xf32> to vector<1x16x16xf32>
    %cst_54 = arith.constant dense<0.000000e+00> : vector<1xf32>
    %222 = vector.multi_reduction <add>, %221, %cst_54 [1, 2] : vector<1x16x16xf32> to vector<1xf32>
    %223 = vector.shape_cast %222 : vector<1xf32> to vector<1x1x1xf32>
    %224 = vector.extract %223[0, 0, 0] : f32 from vector<1x1x1xf32>
    %225 = vector.broadcast %224 : f32 to vector<1x1xf32>
    %cst_55 = arith.constant 2.560000e+02 : f32
    %226 = vector.broadcast %cst_55 : f32 to vector<1x1xf32>
    %227 = arith.divf %225, %226 : vector<1x1xf32>
    %c0_56 = arith.constant 0 : index
    %c3_57 = arith.constant 3 : index
    %c0_58 = arith.constant 0 : index
    %c0_59 = arith.constant 0 : index
    %228 = vector.load %arg5[%c0_56, %c3_57, %c0_58, %c0_59] : memref<1x4x1x1xf32, #tpu.memory_space<vmem>>, vector<1x1x1x1xf32>
    %229 = vector.shape_cast %228 : vector<1x1x1x1xf32> to vector<1x1xf32>
    %230 = vector.shape_cast %227 : vector<1x1xf32> to vector<1x1x1x1xf32>
    tpu.vector_store %arg5[%c0_56, %c3_57, %c0_58, %c0_59], %230 {strides = array<i32>} : memref<1x4x1x1xf32, #tpu.memory_space<vmem>>, vector<1x1x1x1xf32>,
    return
  }
  func.func @transform_0(%arg0: i32, %arg1: i32) -> i32 {
    %c0_i32 = arith.constant 0 : i32
    %c0_i32_0 = arith.constant 0 : i32
    return %c0_i32 : i32
  }
  func.func @transform_1(%arg0: i32, %arg1: i32) -> (i32, i32, i32, i32) {
    %c0_i32 = arith.constant 0 : i32
    %c0_i32_0 = arith.constant 0 : i32
    %c0_i32_1 = arith.constant 0 : i32
    return %arg0, %arg1, %c0_i32, %c0_i32_0 : i32, i32, i32, i32
  }
  func.func @transform_2(%arg0: i32, %arg1: i32) -> (i32, i32, i32, i32) {
    %c0_i32 = arith.constant 0 : i32
    %c0_i32_0 = arith.constant 0 : i32
    %c0_i32_1 = arith.constant 0 : i32
    return %arg0, %arg1, %c0_i32, %c0_i32_0 : i32, i32, i32, i32
  }
  func.func @transform_3(%arg0: i32, %arg1: i32) -> (i32, i32, i32, i32) {
    %c0_i32 = arith.constant 0 : i32
    %c0_i32_0 = arith.constant 0 : i32
    %c0_i32_1 = arith.constant 0 : i32
    return %arg0, %arg1, %c0_i32, %c0_i32_0 : i32, i32, i32, i32
  }
}

module attributes {stable_mosaic.version = 11 : i64} {
  func.func @kernel(%arg0: i32, %arg1: i32, %arg2: memref<48xf32, #tpu.memory_space<smem>>, %arg3: memref<1x4x16x16xf32, #tpu.memory_space<vmem>>, %arg4: memref<1x4x16x16xf32, #tpu.memory_space<vmem>>, %arg5: memref<1x4x16x16xf32, #tpu.memory_space<vmem>>) attributes {dimension_semantics = [#tpu.dimension_semantics<parallel>, #tpu.dimension_semantics<parallel>], iteration_bounds = array<i64: 2, 1>, scalar_prefetch = 0 : i64, scratch_operands = 0 : i64, tpu.core_type = #tpu.core_type<tc>, window_params = [{transform_indices = @transform_0, window_bounds = array<i64: 48>}, {transform_indices = @transform_1, window_bounds = array<i64: 1, 4, 16, 16>}, {transform_indices = @transform_2, window_bounds = array<i64: 1, 4, 16, 16>}, {transform_indices = @transform_3, window_bounds = array<i64: 1, 4, 16, 16>}]} {
    %c0 = arith.constant 0 : index
    %c0_0 = arith.constant 0 : index
    %c0_1 = arith.constant 0 : index
    %c0_2 = arith.constant 0 : index
    %0 = vector.load %arg3[%c0, %c0_0, %c0_1, %c0_2] : memref<1x4x16x16xf32, #tpu.memory_space<vmem>>, vector<1x4x16x16xf32>
    %c0_3 = arith.constant 0 : index
    %c0_4 = arith.constant 0 : index
    %c0_5 = arith.constant 0 : index
    %c0_6 = arith.constant 0 : index
    %1 = vector.load %arg4[%c0_3, %c0_4, %c0_5, %c0_6] : memref<1x4x16x16xf32, #tpu.memory_space<vmem>>, vector<1x4x16x16xf32>
    %2 = vector.extract_strided_slice %0 {offsets = [0, 0, 1, 0], sizes = [1, 4, 1, 16], strides = [1, 1, 1, 1]} : vector<1x4x16x16xf32> to vector<1x4x1x16xf32>
    %3 = vector.extract_strided_slice %0 {offsets = [0, 0, 0, 0], sizes = [1, 4, 15, 16], strides = [1, 1, 1, 1]} : vector<1x4x16x16xf32> to vector<1x4x15x16xf32>
    %4 = tpu.concatenate %2, %3 in 2 : vector<1x4x1x16xf32>, vector<1x4x15x16xf32> -> vector<1x4x16x16xf32>
    %5 = vector.extract_strided_slice %0 {offsets = [0, 0, 1, 0], sizes = [1, 4, 15, 16], strides = [1, 1, 1, 1]} : vector<1x4x16x16xf32> to vector<1x4x15x16xf32>
    %6 = vector.extract_strided_slice %0 {offsets = [0, 0, 14, 0], sizes = [1, 4, 1, 16], strides = [1, 1, 1, 1]} : vector<1x4x16x16xf32> to vector<1x4x1x16xf32>
    %7 = tpu.concatenate %5, %6 in 2 : vector<1x4x15x16xf32>, vector<1x4x1x16xf32> -> vector<1x4x16x16xf32>
    %cst = arith.constant dense<0.000000e+00> : vector<1x4x16xf32>
    %8 = vector.multi_reduction <add>, %0, %cst [2] : vector<1x4x16x16xf32> to vector<1x4x16xf32>
    %9 = vector.shape_cast %8 : vector<1x4x16xf32> to vector<1x4x1x16xf32>
    %cst_7 = arith.constant 1.600000e+01 : f32
    %10 = vector.broadcast %cst_7 : f32 to vector<1x4x1x16xf32>
    %11 = arith.divf %9, %10 : vector<1x4x1x16xf32>
    %c4_i32 = arith.constant 4 : i32
    %12 = arith.muli %arg0, %c4_i32 : i32
    %c4_i32_8 = arith.constant 4 : i32
    %13 = arith.muli %arg1, %c4_i32_8 : i32
    %14 = arith.addi %12, %13 : i32
    %c6_i32 = arith.constant 6 : i32
    %15 = arith.muli %14, %c6_i32 : i32
    %c0_i32 = arith.constant 0 : i32
    %16 = arith.addi %15, %c0_i32 : i32
    %17 = arith.index_cast %16 : i32 to index
    %18 = memref.load %arg2[%17] : memref<48xf32, #tpu.memory_space<smem>>
    %19 = vector.extract_strided_slice %4 {offsets = [0, 0, 0, 0], sizes = [1, 1, 16, 16], strides = [1, 1, 1, 1]} : vector<1x4x16x16xf32> to vector<1x1x16x16xf32>
    %20 = vector.shape_cast %19 : vector<1x1x16x16xf32> to vector<16x16xf32>
    %21 = vector.broadcast %18 : f32 to vector<16x16xf32>
    %22 = arith.mulf %21, %20 : vector<16x16xf32>
    %c1_i32 = arith.constant 1 : i32
    %23 = arith.addi %16, %c1_i32 : i32
    %24 = arith.index_cast %23 : i32 to index
    %25 = memref.load %arg2[%24] : memref<48xf32, #tpu.memory_space<smem>>
    %26 = vector.extract_strided_slice %0 {offsets = [0, 0, 0, 0], sizes = [1, 1, 16, 16], strides = [1, 1, 1, 1]} : vector<1x4x16x16xf32> to vector<1x1x16x16xf32>
    %27 = vector.shape_cast %26 : vector<1x1x16x16xf32> to vector<16x16xf32>
    %28 = vector.broadcast %25 : f32 to vector<16x16xf32>
    %29 = arith.mulf %28, %27 : vector<16x16xf32>
    %30 = arith.addf %22, %29 : vector<16x16xf32>
    %c2_i32 = arith.constant 2 : i32
    %31 = arith.addi %16, %c2_i32 : i32
    %32 = arith.index_cast %31 : i32 to index
    %33 = memref.load %arg2[%32] : memref<48xf32, #tpu.memory_space<smem>>
    %34 = vector.extract_strided_slice %7 {offsets = [0, 0, 0, 0], sizes = [1, 1, 16, 16], strides = [1, 1, 1, 1]} : vector<1x4x16x16xf32> to vector<1x1x16x16xf32>
    %35 = vector.shape_cast %34 : vector<1x1x16x16xf32> to vector<16x16xf32>
    %36 = vector.broadcast %33 : f32 to vector<16x16xf32>
    %37 = arith.mulf %36, %35 : vector<16x16xf32>
    %38 = arith.addf %30, %37 : vector<16x16xf32>
    %c3_i32 = arith.constant 3 : i32
    %39 = arith.addi %16, %c3_i32 : i32
    %40 = arith.index_cast %39 : i32 to index
    %41 = memref.load %arg2[%40] : memref<48xf32, #tpu.memory_space<smem>>
    %42 = vector.extract_strided_slice %11 {offsets = [0, 0, 0, 0], sizes = [1, 1, 1, 16], strides = [1, 1, 1, 1]} : vector<1x4x1x16xf32> to vector<1x1x1x16xf32>
    %43 = vector.shape_cast %42 : vector<1x1x1x16xf32> to vector<1x16xf32>
    %44 = vector.broadcast %41 : f32 to vector<1x16xf32>
    %45 = arith.mulf %44, %43 : vector<1x16xf32>
    %46 = vector.broadcast %45 : vector<1x16xf32> to vector<16x16xf32>
    %47 = arith.addf %38, %46 : vector<16x16xf32>
    %c3_i32_9 = arith.constant 3 : i32
    %48 = arith.addi %16, %c3_i32_9 : i32
    %c1_i32_10 = arith.constant 1 : i32
    %49 = arith.addi %48, %c1_i32_10 : i32
    %50 = arith.index_cast %49 : i32 to index
    %51 = memref.load %arg2[%50] : memref<48xf32, #tpu.memory_space<smem>>
    %52 = vector.extract_strided_slice %0 {offsets = [0, 0, 0, 0], sizes = [1, 1, 16, 16], strides = [1, 1, 1, 1]} : vector<1x4x16x16xf32> to vector<1x1x16x16xf32>
    %53 = vector.shape_cast %52 : vector<1x1x16x16xf32> to vector<16x16xf32>
    %54 = vector.broadcast %51 : f32 to vector<16x16xf32>
    %55 = arith.mulf %54, %53 : vector<16x16xf32>
    %56 = arith.addf %47, %55 : vector<16x16xf32>
    %c3_i32_11 = arith.constant 3 : i32
    %57 = arith.addi %16, %c3_i32_11 : i32
    %c2_i32_12 = arith.constant 2 : i32
    %58 = arith.addi %57, %c2_i32_12 : i32
    %59 = arith.index_cast %58 : i32 to index
    %60 = memref.load %arg2[%59] : memref<48xf32, #tpu.memory_space<smem>>
    %61 = vector.extract_strided_slice %1 {offsets = [0, 0, 0, 0], sizes = [1, 1, 16, 16], strides = [1, 1, 1, 1]} : vector<1x4x16x16xf32> to vector<1x1x16x16xf32>
    %62 = vector.shape_cast %61 : vector<1x1x16x16xf32> to vector<16x16xf32>
    %63 = vector.broadcast %60 : f32 to vector<16x16xf32>
    %64 = arith.mulf %63, %62 : vector<16x16xf32>
    %65 = arith.addf %56, %64 : vector<16x16xf32>
    %c0_13 = arith.constant 0 : index
    %c0_14 = arith.constant 0 : index
    %c0_15 = arith.constant 0 : index
    %c0_16 = arith.constant 0 : index
    %66 = vector.load %arg5[%c0_13, %c0_14, %c0_15, %c0_16] : memref<1x4x16x16xf32, #tpu.memory_space<vmem>>, vector<1x1x16x16xf32>
    %67 = vector.shape_cast %66 : vector<1x1x16x16xf32> to vector<16x16xf32>
    %68 = vector.shape_cast %65 : vector<16x16xf32> to vector<1x1x16x16xf32>
    tpu.vector_store %arg5[%c0_13, %c0_14, %c0_15, %c0_16], %68 {strides = array<i32>} : memref<1x4x16x16xf32, #tpu.memory_space<vmem>>, vector<1x1x16x16xf32>,
    %c6_i32_17 = arith.constant 6 : i32
    %69 = arith.addi %15, %c6_i32_17 : i32
    %70 = arith.index_cast %69 : i32 to index
    %71 = memref.load %arg2[%70] : memref<48xf32, #tpu.memory_space<smem>>
    %72 = vector.extract_strided_slice %4 {offsets = [0, 1, 0, 0], sizes = [1, 1, 16, 16], strides = [1, 1, 1, 1]} : vector<1x4x16x16xf32> to vector<1x1x16x16xf32>
    %73 = vector.shape_cast %72 : vector<1x1x16x16xf32> to vector<16x16xf32>
    %74 = vector.broadcast %71 : f32 to vector<16x16xf32>
    %75 = arith.mulf %74, %73 : vector<16x16xf32>
    %c1_i32_18 = arith.constant 1 : i32
    %76 = arith.addi %69, %c1_i32_18 : i32
    %77 = arith.index_cast %76 : i32 to index
    %78 = memref.load %arg2[%77] : memref<48xf32, #tpu.memory_space<smem>>
    %79 = vector.extract_strided_slice %0 {offsets = [0, 1, 0, 0], sizes = [1, 1, 16, 16], strides = [1, 1, 1, 1]} : vector<1x4x16x16xf32> to vector<1x1x16x16xf32>
    %80 = vector.shape_cast %79 : vector<1x1x16x16xf32> to vector<16x16xf32>
    %81 = vector.broadcast %78 : f32 to vector<16x16xf32>
    %82 = arith.mulf %81, %80 : vector<16x16xf32>
    %83 = arith.addf %75, %82 : vector<16x16xf32>
    %c2_i32_19 = arith.constant 2 : i32
    %84 = arith.addi %69, %c2_i32_19 : i32
    %85 = arith.index_cast %84 : i32 to index
    %86 = memref.load %arg2[%85] : memref<48xf32, #tpu.memory_space<smem>>
    %87 = vector.extract_strided_slice %7 {offsets = [0, 1, 0, 0], sizes = [1, 1, 16, 16], strides = [1, 1, 1, 1]} : vector<1x4x16x16xf32> to vector<1x1x16x16xf32>
    %88 = vector.shape_cast %87 : vector<1x1x16x16xf32> to vector<16x16xf32>
    %89 = vector.broadcast %86 : f32 to vector<16x16xf32>
    %90 = arith.mulf %89, %88 : vector<16x16xf32>
    %91 = arith.addf %83, %90 : vector<16x16xf32>
    %c3_i32_20 = arith.constant 3 : i32
    %92 = arith.addi %69, %c3_i32_20 : i32
    %93 = arith.index_cast %92 : i32 to index
    %94 = memref.load %arg2[%93] : memref<48xf32, #tpu.memory_space<smem>>
    %95 = vector.extract_strided_slice %11 {offsets = [0, 1, 0, 0], sizes = [1, 1, 1, 16], strides = [1, 1, 1, 1]} : vector<1x4x1x16xf32> to vector<1x1x1x16xf32>
    %96 = vector.shape_cast %95 : vector<1x1x1x16xf32> to vector<1x16xf32>
    %97 = vector.broadcast %94 : f32 to vector<1x16xf32>
    %98 = arith.mulf %97, %96 : vector<1x16xf32>
    %99 = vector.broadcast %98 : vector<1x16xf32> to vector<16x16xf32>
    %100 = arith.addf %91, %99 : vector<16x16xf32>
    %c3_i32_21 = arith.constant 3 : i32
    %101 = arith.addi %69, %c3_i32_21 : i32
    %c1_i32_22 = arith.constant 1 : i32
    %102 = arith.addi %101, %c1_i32_22 : i32
    %103 = arith.index_cast %102 : i32 to index
    %104 = memref.load %arg2[%103] : memref<48xf32, #tpu.memory_space<smem>>
    %105 = vector.extract_strided_slice %0 {offsets = [0, 1, 0, 0], sizes = [1, 1, 16, 16], strides = [1, 1, 1, 1]} : vector<1x4x16x16xf32> to vector<1x1x16x16xf32>
    %106 = vector.shape_cast %105 : vector<1x1x16x16xf32> to vector<16x16xf32>
    %107 = vector.broadcast %104 : f32 to vector<16x16xf32>
    %108 = arith.mulf %107, %106 : vector<16x16xf32>
    %109 = arith.addf %100, %108 : vector<16x16xf32>
    %c3_i32_23 = arith.constant 3 : i32
    %110 = arith.addi %69, %c3_i32_23 : i32
    %c2_i32_24 = arith.constant 2 : i32
    %111 = arith.addi %110, %c2_i32_24 : i32
    %112 = arith.index_cast %111 : i32 to index
    %113 = memref.load %arg2[%112] : memref<48xf32, #tpu.memory_space<smem>>
    %114 = vector.extract_strided_slice %1 {offsets = [0, 1, 0, 0], sizes = [1, 1, 16, 16], strides = [1, 1, 1, 1]} : vector<1x4x16x16xf32> to vector<1x1x16x16xf32>
    %115 = vector.shape_cast %114 : vector<1x1x16x16xf32> to vector<16x16xf32>
    %116 = vector.broadcast %113 : f32 to vector<16x16xf32>
    %117 = arith.mulf %116, %115 : vector<16x16xf32>
    %118 = arith.addf %109, %117 : vector<16x16xf32>
    %c0_25 = arith.constant 0 : index
    %c1 = arith.constant 1 : index
    %c0_26 = arith.constant 0 : index
    %c0_27 = arith.constant 0 : index
    %119 = vector.load %arg5[%c0_25, %c1, %c0_26, %c0_27] : memref<1x4x16x16xf32, #tpu.memory_space<vmem>>, vector<1x1x16x16xf32>
    %120 = vector.shape_cast %119 : vector<1x1x16x16xf32> to vector<16x16xf32>
    %121 = vector.shape_cast %118 : vector<16x16xf32> to vector<1x1x16x16xf32>
    tpu.vector_store %arg5[%c0_25, %c1, %c0_26, %c0_27], %121 {strides = array<i32>} : memref<1x4x16x16xf32, #tpu.memory_space<vmem>>, vector<1x1x16x16xf32>,
    %c12_i32 = arith.constant 12 : i32
    %122 = arith.addi %15, %c12_i32 : i32
    %123 = arith.index_cast %122 : i32 to index
    %124 = memref.load %arg2[%123] : memref<48xf32, #tpu.memory_space<smem>>
    %125 = vector.extract_strided_slice %4 {offsets = [0, 2, 0, 0], sizes = [1, 1, 16, 16], strides = [1, 1, 1, 1]} : vector<1x4x16x16xf32> to vector<1x1x16x16xf32>
    %126 = vector.shape_cast %125 : vector<1x1x16x16xf32> to vector<16x16xf32>
    %127 = vector.broadcast %124 : f32 to vector<16x16xf32>
    %128 = arith.mulf %127, %126 : vector<16x16xf32>
    %c1_i32_28 = arith.constant 1 : i32
    %129 = arith.addi %122, %c1_i32_28 : i32
    %130 = arith.index_cast %129 : i32 to index
    %131 = memref.load %arg2[%130] : memref<48xf32, #tpu.memory_space<smem>>
    %132 = vector.extract_strided_slice %0 {offsets = [0, 2, 0, 0], sizes = [1, 1, 16, 16], strides = [1, 1, 1, 1]} : vector<1x4x16x16xf32> to vector<1x1x16x16xf32>
    %133 = vector.shape_cast %132 : vector<1x1x16x16xf32> to vector<16x16xf32>
    %134 = vector.broadcast %131 : f32 to vector<16x16xf32>
    %135 = arith.mulf %134, %133 : vector<16x16xf32>
    %136 = arith.addf %128, %135 : vector<16x16xf32>
    %c2_i32_29 = arith.constant 2 : i32
    %137 = arith.addi %122, %c2_i32_29 : i32
    %138 = arith.index_cast %137 : i32 to index
    %139 = memref.load %arg2[%138] : memref<48xf32, #tpu.memory_space<smem>>
    %140 = vector.extract_strided_slice %7 {offsets = [0, 2, 0, 0], sizes = [1, 1, 16, 16], strides = [1, 1, 1, 1]} : vector<1x4x16x16xf32> to vector<1x1x16x16xf32>
    %141 = vector.shape_cast %140 : vector<1x1x16x16xf32> to vector<16x16xf32>
    %142 = vector.broadcast %139 : f32 to vector<16x16xf32>
    %143 = arith.mulf %142, %141 : vector<16x16xf32>
    %144 = arith.addf %136, %143 : vector<16x16xf32>
    %c3_i32_30 = arith.constant 3 : i32
    %145 = arith.addi %122, %c3_i32_30 : i32
    %146 = arith.index_cast %145 : i32 to index
    %147 = memref.load %arg2[%146] : memref<48xf32, #tpu.memory_space<smem>>
    %148 = vector.extract_strided_slice %11 {offsets = [0, 2, 0, 0], sizes = [1, 1, 1, 16], strides = [1, 1, 1, 1]} : vector<1x4x1x16xf32> to vector<1x1x1x16xf32>
    %149 = vector.shape_cast %148 : vector<1x1x1x16xf32> to vector<1x16xf32>
    %150 = vector.broadcast %147 : f32 to vector<1x16xf32>
    %151 = arith.mulf %150, %149 : vector<1x16xf32>
    %152 = vector.broadcast %151 : vector<1x16xf32> to vector<16x16xf32>
    %153 = arith.addf %144, %152 : vector<16x16xf32>
    %c3_i32_31 = arith.constant 3 : i32
    %154 = arith.addi %122, %c3_i32_31 : i32
    %c1_i32_32 = arith.constant 1 : i32
    %155 = arith.addi %154, %c1_i32_32 : i32
    %156 = arith.index_cast %155 : i32 to index
    %157 = memref.load %arg2[%156] : memref<48xf32, #tpu.memory_space<smem>>
    %158 = vector.extract_strided_slice %0 {offsets = [0, 2, 0, 0], sizes = [1, 1, 16, 16], strides = [1, 1, 1, 1]} : vector<1x4x16x16xf32> to vector<1x1x16x16xf32>
    %159 = vector.shape_cast %158 : vector<1x1x16x16xf32> to vector<16x16xf32>
    %160 = vector.broadcast %157 : f32 to vector<16x16xf32>
    %161 = arith.mulf %160, %159 : vector<16x16xf32>
    %162 = arith.addf %153, %161 : vector<16x16xf32>
    %c3_i32_33 = arith.constant 3 : i32
    %163 = arith.addi %122, %c3_i32_33 : i32
    %c2_i32_34 = arith.constant 2 : i32
    %164 = arith.addi %163, %c2_i32_34 : i32
    %165 = arith.index_cast %164 : i32 to index
    %166 = memref.load %arg2[%165] : memref<48xf32, #tpu.memory_space<smem>>
    %167 = vector.extract_strided_slice %1 {offsets = [0, 2, 0, 0], sizes = [1, 1, 16, 16], strides = [1, 1, 1, 1]} : vector<1x4x16x16xf32> to vector<1x1x16x16xf32>
    %168 = vector.shape_cast %167 : vector<1x1x16x16xf32> to vector<16x16xf32>
    %169 = vector.broadcast %166 : f32 to vector<16x16xf32>
    %170 = arith.mulf %169, %168 : vector<16x16xf32>
    %171 = arith.addf %162, %170 : vector<16x16xf32>
    %c0_35 = arith.constant 0 : index
    %c2 = arith.constant 2 : index
    %c0_36 = arith.constant 0 : index
    %c0_37 = arith.constant 0 : index
    %172 = vector.load %arg5[%c0_35, %c2, %c0_36, %c0_37] : memref<1x4x16x16xf32, #tpu.memory_space<vmem>>, vector<1x1x16x16xf32>
    %173 = vector.shape_cast %172 : vector<1x1x16x16xf32> to vector<16x16xf32>
    %174 = vector.shape_cast %171 : vector<16x16xf32> to vector<1x1x16x16xf32>
    tpu.vector_store %arg5[%c0_35, %c2, %c0_36, %c0_37], %174 {strides = array<i32>} : memref<1x4x16x16xf32, #tpu.memory_space<vmem>>, vector<1x1x16x16xf32>,
    %c18_i32 = arith.constant 18 : i32
    %175 = arith.addi %15, %c18_i32 : i32
    %176 = arith.index_cast %175 : i32 to index
    %177 = memref.load %arg2[%176] : memref<48xf32, #tpu.memory_space<smem>>
    %178 = vector.extract_strided_slice %4 {offsets = [0, 3, 0, 0], sizes = [1, 1, 16, 16], strides = [1, 1, 1, 1]} : vector<1x4x16x16xf32> to vector<1x1x16x16xf32>
    %179 = vector.shape_cast %178 : vector<1x1x16x16xf32> to vector<16x16xf32>
    %180 = vector.broadcast %177 : f32 to vector<16x16xf32>
    %181 = arith.mulf %180, %179 : vector<16x16xf32>
    %c1_i32_38 = arith.constant 1 : i32
    %182 = arith.addi %175, %c1_i32_38 : i32
    %183 = arith.index_cast %182 : i32 to index
    %184 = memref.load %arg2[%183] : memref<48xf32, #tpu.memory_space<smem>>
    %185 = vector.extract_strided_slice %0 {offsets = [0, 3, 0, 0], sizes = [1, 1, 16, 16], strides = [1, 1, 1, 1]} : vector<1x4x16x16xf32> to vector<1x1x16x16xf32>
    %186 = vector.shape_cast %185 : vector<1x1x16x16xf32> to vector<16x16xf32>
    %187 = vector.broadcast %184 : f32 to vector<16x16xf32>
    %188 = arith.mulf %187, %186 : vector<16x16xf32>
    %189 = arith.addf %181, %188 : vector<16x16xf32>
    %c2_i32_39 = arith.constant 2 : i32
    %190 = arith.addi %175, %c2_i32_39 : i32
    %191 = arith.index_cast %190 : i32 to index
    %192 = memref.load %arg2[%191] : memref<48xf32, #tpu.memory_space<smem>>
    %193 = vector.extract_strided_slice %7 {offsets = [0, 3, 0, 0], sizes = [1, 1, 16, 16], strides = [1, 1, 1, 1]} : vector<1x4x16x16xf32> to vector<1x1x16x16xf32>
    %194 = vector.shape_cast %193 : vector<1x1x16x16xf32> to vector<16x16xf32>
    %195 = vector.broadcast %192 : f32 to vector<16x16xf32>
    %196 = arith.mulf %195, %194 : vector<16x16xf32>
    %197 = arith.addf %189, %196 : vector<16x16xf32>
    %c3_i32_40 = arith.constant 3 : i32
    %198 = arith.addi %175, %c3_i32_40 : i32
    %199 = arith.index_cast %198 : i32 to index
    %200 = memref.load %arg2[%199] : memref<48xf32, #tpu.memory_space<smem>>
    %201 = vector.extract_strided_slice %11 {offsets = [0, 3, 0, 0], sizes = [1, 1, 1, 16], strides = [1, 1, 1, 1]} : vector<1x4x1x16xf32> to vector<1x1x1x16xf32>
    %202 = vector.shape_cast %201 : vector<1x1x1x16xf32> to vector<1x16xf32>
    %203 = vector.broadcast %200 : f32 to vector<1x16xf32>
    %204 = arith.mulf %203, %202 : vector<1x16xf32>
    %205 = vector.broadcast %204 : vector<1x16xf32> to vector<16x16xf32>
    %206 = arith.addf %197, %205 : vector<16x16xf32>
    %c3_i32_41 = arith.constant 3 : i32
    %207 = arith.addi %175, %c3_i32_41 : i32
    %c1_i32_42 = arith.constant 1 : i32
    %208 = arith.addi %207, %c1_i32_42 : i32
    %209 = arith.index_cast %208 : i32 to index
    %210 = memref.load %arg2[%209] : memref<48xf32, #tpu.memory_space<smem>>
    %211 = vector.extract_strided_slice %0 {offsets = [0, 3, 0, 0], sizes = [1, 1, 16, 16], strides = [1, 1, 1, 1]} : vector<1x4x16x16xf32> to vector<1x1x16x16xf32>
    %212 = vector.shape_cast %211 : vector<1x1x16x16xf32> to vector<16x16xf32>
    %213 = vector.broadcast %210 : f32 to vector<16x16xf32>
    %214 = arith.mulf %213, %212 : vector<16x16xf32>
    %215 = arith.addf %206, %214 : vector<16x16xf32>
    %c3_i32_43 = arith.constant 3 : i32
    %216 = arith.addi %175, %c3_i32_43 : i32
    %c2_i32_44 = arith.constant 2 : i32
    %217 = arith.addi %216, %c2_i32_44 : i32
    %218 = arith.index_cast %217 : i32 to index
    %219 = memref.load %arg2[%218] : memref<48xf32, #tpu.memory_space<smem>>
    %220 = vector.extract_strided_slice %1 {offsets = [0, 3, 0, 0], sizes = [1, 1, 16, 16], strides = [1, 1, 1, 1]} : vector<1x4x16x16xf32> to vector<1x1x16x16xf32>
    %221 = vector.shape_cast %220 : vector<1x1x16x16xf32> to vector<16x16xf32>
    %222 = vector.broadcast %219 : f32 to vector<16x16xf32>
    %223 = arith.mulf %222, %221 : vector<16x16xf32>
    %224 = arith.addf %215, %223 : vector<16x16xf32>
    %c0_45 = arith.constant 0 : index
    %c3 = arith.constant 3 : index
    %c0_46 = arith.constant 0 : index
    %c0_47 = arith.constant 0 : index
    %225 = vector.load %arg5[%c0_45, %c3, %c0_46, %c0_47] : memref<1x4x16x16xf32, #tpu.memory_space<vmem>>, vector<1x1x16x16xf32>
    %226 = vector.shape_cast %225 : vector<1x1x16x16xf32> to vector<16x16xf32>
    %227 = vector.shape_cast %224 : vector<16x16xf32> to vector<1x1x16x16xf32>
    tpu.vector_store %arg5[%c0_45, %c3, %c0_46, %c0_47], %227 {strides = array<i32>} : memref<1x4x16x16xf32, #tpu.memory_space<vmem>>, vector<1x1x16x16xf32>,
    return
  }
  func.func @transform_0(%arg0: i32, %arg1: i32) -> i32 {
    %c0_i32 = arith.constant 0 : i32
    %c0_i32_0 = arith.constant 0 : i32
    return %c0_i32 : i32
  }
  func.func @transform_1(%arg0: i32, %arg1: i32) -> (i32, i32, i32, i32) {
    %c0_i32 = arith.constant 0 : i32
    %c0_i32_0 = arith.constant 0 : i32
    %c0_i32_1 = arith.constant 0 : i32
    return %arg0, %arg1, %c0_i32, %c0_i32_0 : i32, i32, i32, i32
  }
  func.func @transform_2(%arg0: i32, %arg1: i32) -> (i32, i32, i32, i32) {
    %c0_i32 = arith.constant 0 : i32
    %c0_i32_0 = arith.constant 0 : i32
    %c0_i32_1 = arith.constant 0 : i32
    return %arg0, %arg1, %c0_i32, %c0_i32_0 : i32, i32, i32, i32
  }
  func.func @transform_3(%arg0: i32, %arg1: i32) -> (i32, i32, i32, i32) {
    %c0_i32 = arith.constant 0 : i32
    %c0_i32_0 = arith.constant 0 : i32
    %c0_i32_1 = arith.constant 0 : i32
    return %arg0, %arg1, %c0_i32, %c0_i32_0 : i32, i32, i32, i32
  }
}

</mosaic_0001>

<llo_original>
// kernel: cubic_attention.2
$region0: #{cubic_attention.2}
  #allocation0 [shape = 'u32[]', space=smem, size = 0x4, offset = 0x4, fixed_abs, tag = 'smem constant byte address 0x4 - core index']
  #allocation1 [shape = 'u32[144,128]{1,0:T(1,128)}', space=vmem, size = 0x12000, scoped, tag = 'internal scratch']
  %s0 = inlined_call_operand.vmem [shape: f32[40], index: 0, kind: input, shape index: {}]
  %s1 = inlined_call_operand.vmem [shape: f32[2,4,16,16], index: 1, kind: input, shape index: {}]
  %s2 = inlined_call_operand.vmem [shape: f32[2,4,16,16], index: 2, kind: output, shape index: {0}]
  %s3 = inlined_call_operand.vmem [shape: f32[2,4,1,1], index: 3, kind: output, shape index: {1}]
  %4 = xla_tuple %s2, %s3
  %s5 = sld [smem:[#allocation0]]
  $region53: #{cubic_attention.2} parent=0
    _
  %s7 = ssub.s32 1, %s5
  %s8 = scalar_select 0, %s7, %s5
  $region1: #{cubic_attention.2} parent=0
    #allocation2 [shape = 'u8[512]{0}', space=smem, size = 0x200, scoped, tag = 'input window, operand 0, single buffered']
    #allocation3 [shape = 's32[2]{0}', space=sflag, size = 0x8, scoped, tag = 'scoped memory for cubic_attention.2']
    %9 = vsyncpa [#allocation3], 0
    loop: start=0, step=1, limit=4
    $region2: #{cubic_attention.2} parent=1 // loop_pre_header
      _
    $region3: #{cubic_attention.2} parent=1 // loop_header
      %s11 = sphi 0, %s15
      %p12 = scmp.ge.s32.totalorder %s11, 4
      %s18 = sphi 0, %s30
      %s19 = sphi 0, %s26
      %s20 = sphi 0, %s18
      %s21 = sphi 0, %s19
      %s22 = sphi 0, %s20
      %s23 = sphi 0, %s21
      %s31 = sphi 0, %s31
      %s33 = sphi 0, %s31
      %s34 = sphi 0, %s33
      %s48 = sphi 0, %s34
      %s56 = sphi 0, %s58
      %s59 = sphi 0, %s56
      %s60 = sphi 0, %s59
      %s76 = sphi 0, %s60
      %s84 = sphi 0, %s86
      %s87 = sphi 0, %s84
      %s88 = sphi 0, %s87
      %s104 = sphi 0, %s88
      %s112 = sphi 0, %s114
      %s115 = sphi 0, %s112
      %s116 = sphi 0, %s115
      %s132 = sphi 0, %s116
    $region4: #{cubic_attention.2} parent=1 // loop_header_branch
      %14 = sbr.rel (%p12) target = $region8
    $region5: #{cubic_attention.2} parent=1 // loop_body
      %s16 = ssub.s32 %s11, 1
      %s17 = ssub.s32 %s11, 2
      %s24 = sadd.s32 1, %s19
      %p25 = scmp.ge.s32.totalorder %s24, 1
      %s26 = scalar_select %p25, 0, %s24
      %s27 = sadd.s32 1, %s18
      %s28 = scalar_select %p25, %s27, %s18
      %p29 = scmp.ge.s32.totalorder %s28, 2
      %s30 = scalar_select %p29, 0, %s28
      %s32 = sadd.s32 %s31, 1
      %p35 = scmp.eq.s32.totalorder %s11, 1
      %p36 = scmp.ne.s32.totalorder %s31, %s33
      %p37 = scmp.eq.s32.totalorder %s11, 0
      %p38 = por %p36, %p37
      %p39 = scmp.ne.s32.totalorder %s31, %s33
      %p40 = scmp.eq.s32.totalorder %s16, 1
      %p41 = por %p39, %p40
      %p42 = scmp.ne.s32.totalorder %s33, %s34
      %p43 = scmp.eq.s32.totalorder %s16, 0
      %p44 = por %p42, %p43
      %p45 = scmp.ne.s32.totalorder %s33, %s34
      %p46 = scmp.eq.s32.totalorder %s17, 1
      %p47 = por %p45, %p46
      %p49 = scmp.ne.s32.totalorder %s34, %s48
      %p50 = scmp.eq.s32.totalorder %s17, 0
      %p51 = por %p49, %p50
      %s52 = ssub.s32 %s18, %s30
      %s53 = ssub.s32 %s19, %s26
      %s54 = sor.u32 %s52, %s53
      %p55 = scmp.eq.s32.totalorder %s54, 0
      %s57 = sadd.s32 %s56, 1
      %s58 = scalar_select %p55, %s56, %s57
      %p61 = pneg %p55
      %p62 = scmp.eq.s32.totalorder %s11, 1
      %p63 = por %p61, %p62
      %p64 = scmp.ne.s32.totalorder %s56, %s59
      %p65 = scmp.eq.s32.totalorder %s11, 0
      %p66 = por %p64, %p65
      %p67 = scmp.ne.s32.totalorder %s56, %s59
      %p68 = scmp.eq.s32.totalorder %s16, 1
      %p69 = por %p67, %p68
      %p70 = scmp.ne.s32.totalorder %s59, %s60
      %p71 = scmp.eq.s32.totalorder %s16, 0
      %p72 = por %p70, %p71
      %p73 = scmp.ne.s32.totalorder %s59, %s60
      %p74 = scmp.eq.s32.totalorder %s17, 1
      %p75 = por %p73, %p74
      %p77 = scmp.ne.s32.totalorder %s60, %s76
      %p78 = scmp.eq.s32.totalorder %s17, 0
      %p79 = por %p77, %p78
      %s80 = ssub.s32 %s18, %s30
      %s81 = ssub.s32 %s19, %s26
      %s82 = sor.u32 %s80, %s81
      %p83 = scmp.eq.s32.totalorder %s82, 0
      %s85 = sadd.s32 %s84, 1
      %s86 = scalar_select %p83, %s84, %s85
      %p89 = pneg %p83
      %p90 = scmp.eq.s32.totalorder %s11, 1
      %p91 = por %p89, %p90
      %p92 = scmp.ne.s32.totalorder %s84, %s87
      %p93 = scmp.eq.s32.totalorder %s11, 0
      %p94 = por %p92, %p93
      %p95 = scmp.ne.s32.totalorder %s84, %s87
      %p96 = scmp.eq.s32.totalorder %s16, 1
      %p97 = por %p95, %p96
      %p98 = scmp.ne.s32.totalorder %s87, %s88
      %p99 = scmp.eq.s32.totalorder %s16, 0
      %p100 = por %p98, %p99
      %p101 = scmp.ne.s32.totalorder %s87, %s88
      %p102 = scmp.eq.s32.totalorder %s17, 1
      %p103 = por %p101, %p102
      %p105 = scmp.ne.s32.totalorder %s88, %s104
      %p106 = scmp.eq.s32.totalorder %s17, 0
      %p107 = por %p105, %p106
      %s108 = ssub.s32 %s18, %s30
      %s109 = ssub.s32 %s19, %s26
      %s110 = sor.u32 %s108, %s109
      %p111 = scmp.eq.s32.totalorder %s110, 0
      %s113 = sadd.s32 %s112, 1
      %s114 = scalar_select %p111, %s112, %s113
      %p117 = pneg %p111
      %p118 = scmp.eq.s32.totalorder %s11, 1
      %p119 = por %p117, %p118
      %p120 = scmp.ne.s32.totalorder %s112, %s115
      %p121 = scmp.eq.s32.totalorder %s11, 0
      %p122 = por %p120, %p121
      %p123 = scmp.ne.s32.totalorder %s112, %s115
      %p124 = scmp.eq.s32.totalorder %s16, 1
      %p125 = por %p123, %p124
      %p126 = scmp.ne.s32.totalorder %s115, %s116
      %p127 = scmp.eq.s32.totalorder %s16, 0
      %p128 = por %p126, %p127
      %p129 = scmp.ne.s32.totalorder %s115, %s116
      %p130 = scmp.eq.s32.totalorder %s17, 1
      %p131 = por %p129, %p130
      %p133 = scmp.ne.s32.totalorder %s116, %s132
      %p134 = scmp.eq.s32.totalorder %s17, 0
      %p135 = por %p133, %p134
      %p136 = scmp.le.s32.totalorder 1, %s11
      %p137 = scmp.lt.s32.totalorder %s11, 3
      %p138 = pnand %p136, %p137
      %p139 = pneg %p138
      // Predicated region
      $region9: #{cubic_attention.2} parent=5 // pred_check
        _
      $region10: #{cubic_attention.2} parent=5 // pred_check_branch
        %141 = sbr.rel (%p138) target = $region12
      $region11: #{cubic_attention.2} parent=5 // pred_region
        %s142 = ssub.s32 %s11, 1
        // Predicated region
        $region13: #{cubic_attention.2} parent=11 // pred_check
          %p143 = pneg %p44
        $region14: #{cubic_attention.2} parent=11 // pred_check_branch
          %145 = sbr.rel (%p143) target = $region16
        $region15: #{cubic_attention.2} parent=11 // pred_region
          %s147 = ssub.s32 16, 16
          %148 = vsyncadd [#allocation3], %s147
          %s150 = sshll.u32 %s0, 4
          %s151 = int_to_ptr.vmem [resolvable:$true] %s150
          %153 = dma.vmem_to_smem %s151, 16, [#allocation2], [#allocation3]
        $region16: #{cubic_attention.2} parent=11 // pred_fallthru
          _
      $region12: #{cubic_attention.2} parent=5 // pred_fallthru
        _
      %p154 = scmp.lt.s32.totalorder %s11, 2
      // Predicated region
      $region17: #{cubic_attention.2} parent=5 // pred_check
        %p155 = pneg %p154
      $region18: #{cubic_attention.2} parent=5 // pred_check_branch
        %157 = sbr.rel (%p155) target = $region20
      $region19: #{cubic_attention.2} parent=5 // pred_region
        // Predicated region
        $region21: #{cubic_attention.2} parent=19 // pred_check
          %p158 = pneg %p66
        $region22: #{cubic_attention.2} parent=19 // pred_check_branch
          %160 = sbr.rel (%p158) target = $region24
        $region23: #{cubic_attention.2} parent=19 // pred_region
          %s161 = smul.u32 4, %s19
          %p162 = scmp.lt.s32.totalorder %s18, 1
          %s163 = scalar_select %p162, %s18, 1
          %p164 = scmp.lt.s32.totalorder %s161, 3
          %s165 = scalar_select %p164, %s161, 3
          %s166 = smul.addr %s165, 2
          %s167 = smul.addr %s163, 8
          %s168 = sadd.s32 %s166, %s167
          %s169 = smul.addr %s168, 8
          %s170 = scalar_lea.vmem %s1, %s169
          %s171 = smul.u32 4, %s19
        $region24: #{cubic_attention.2} parent=19 // pred_fallthru
          _
      $region20: #{cubic_attention.2} parent=5 // pred_fallthru
        _
      %p172 = scmp.le.s32.totalorder 1, %s11
      %p173 = scmp.lt.s32.totalorder %s11, 3
      %p174 = pnand %p172, %p173
      %p175 = pneg %p174
      // Predicated region
      $region25: #{cubic_attention.2} parent=5 // pred_check
        _
      $region26: #{cubic_attention.2} parent=5 // pred_check_branch
        %177 = sbr.rel (%p174) target = $region28
      $region27: #{cubic_attention.2} parent=5 // pred_region
        %s178 = ssub.s32 %s11, 1
        // Predicated region
        $region29: #{cubic_attention.2} parent=27 // pred_check
          %p179 = pneg %p44
        $region30: #{cubic_attention.2} parent=27 // pred_check_branch
          %181 = sbr.rel (%p179) target = $region32
        $region31: #{cubic_attention.2} parent=27 // pred_region
          %182 = dma.done [#allocation3], 16
        $region32: #{cubic_attention.2} parent=27 // pred_fallthru
          _
        %183 = sfence
        %p184 = pneg %p44
        %p185 = pneg %p41
        %s186 = smul.u32 4, %s21
        %p187 = scmp.lt.s32.totalorder %s20, 1
        %s188 = scalar_select %p187, %s20, 1
        %p189 = scmp.lt.s32.totalorder %s186, 3
        %s190 = scalar_select %p189, %s186, 3
        %s191 = smul.addr %s190, 2
        %s192 = smul.addr %s188, 8
        %s193 = sadd.s32 %s191, %s192
        %s194 = smul.addr %s193, 8
        %s195 = scalar_lea.vmem %s1, %s194
        %p196 = pneg %p72
        %p197 = pneg %p69
        %p198 = pneg %p100
        %p199 = pneg %p97
        %s200 = smul.u32 4, %s21
        %p201 = scmp.lt.s32.totalorder %s20, 1
        %s202 = scalar_select %p201, %s20, 1
        %p203 = scmp.lt.s32.totalorder %s200, 3
        %s204 = scalar_select %p203, %s200, 3
        %s205 = smul.addr %s204, 2
        %s206 = smul.addr %s202, 8
        %s207 = sadd.s32 %s205, %s206
        %s208 = smul.addr %s207, 8
        %s209 = scalar_lea.vmem %s2, %s208
        %p210 = pneg %p128
        %p211 = pneg %p125
        %s212 = smul.u32 4, %s21
        %p213 = scmp.lt.s32.totalorder %s20, 1
        %s214 = scalar_select %p213, %s20, 1
        %p215 = scmp.lt.s32.totalorder %s212, 3
        %s216 = scalar_select %p215, %s212, 3
        %s217 = smul.addr %s214, 4
        %s218 = sadd.s32 %s216, %s217
        %s219 = scalar_lea.vmem %s3, %s218
        %s220 = smul.u32 4, %s21
        %p221 = scmp.lt.s32.totalorder %s20, 1
        %s222 = scalar_select %p221, %s20, 1
        %p223 = scmp.lt.s32.totalorder %s220, 3
        %s224 = scalar_select %p223, %s220, 3
        %s225 = smul.addr %s224, 2
        %s226 = smul.addr %s222, 8
        %s227 = sadd.s32 %s225, %s226
        %s228 = smul.addr %s227, 8
        %s229 = scalar_lea.vmem %s1, %s228
        %s230 = smul.u32 4, %s21
        %s231 = smul.u32 4, %s21
        %p232 = scmp.lt.s32.totalorder %s20, 1
        %s233 = scalar_select %p232, %s20, 1
        %p234 = scmp.lt.s32.totalorder %s231, 3
        %s235 = scalar_select %p234, %s231, 3
        %s236 = smul.addr %s235, 2
        %s237 = smul.addr %s233, 8
        %s238 = sadd.s32 %s236, %s237
        %s239 = smul.addr %s238, 8
        %s240 = scalar_lea.vmem %s2, %s239
        %s241 = smul.u32 4, %s21
        %s242 = smul.u32 4, %s21
        %p243 = scmp.lt.s32.totalorder %s20, 1
        %s244 = scalar_select %p243, %s20, 1
        %p245 = scmp.lt.s32.totalorder %s242, 3
        %s246 = scalar_select %p245, %s242, 3
        %s247 = smul.addr %s244, 4
        %s248 = sadd.s32 %s246, %s247
        %s249 = scalar_lea.vmem %s3, %s248
        %s250 = smul.u32 4, %s21
        %v251 = vld [vmem:[%s229] sm:$0xff]
        %v252 = vld [vmem:[%s229 + $0x8] sm:$0xff]
        %v253 = vld [vmem:[%s229 + $0x10] sm:$0xff]
        %v254 = vld [vmem:[%s229 + $0x18] sm:$0xff]
        %v255 = vld [vmem:[%s229 + $0x20] sm:$0xff]
        %v256 = vld [vmem:[%s229 + $0x28] sm:$0xff]
        %v257 = vld [vmem:[%s229 + $0x30] sm:$0xff]
        %v258 = vld [vmem:[%s229 + $0x38] sm:$0xff]
        %267 = vrot.lane.b32.xlu0 %v251, 127
        %v268 = vpop.permute.xlu0 %267
        %269 = vrot.lane.b32.xlu0 %v252, 127
        %v270 = vpop.permute.xlu0 %269
        %271 = vrot.lane.b32.xlu0 %v253, 127
        %v272 = vpop.permute.xlu0 %271
        %273 = vrot.lane.b32.xlu0 %v254, 127
        %v274 = vpop.permute.xlu0 %273
        %275 = vrot.lane.b32.xlu0 %v255, 127
        %v276 = vpop.permute.xlu0 %275
        %277 = vrot.lane.b32.xlu0 %v256, 127
        %v278 = vpop.permute.xlu0 %277
        %279 = vrot.lane.b32.xlu0 %v257, 127
        %v280 = vpop.permute.xlu0 %279
        %281 = vrot.lane.b32.xlu0 %v258, 127
        %v282 = vpop.permute.xlu0 %281
        %291 = vrot.lane.b32.xlu0 %v251, 1
        %v292 = vpop.permute.xlu0 %291
        %293 = vrot.lane.b32.xlu0 %v252, 1
        %v294 = vpop.permute.xlu0 %293
        %295 = vrot.lane.b32.xlu0 %v253, 1
        %v296 = vpop.permute.xlu0 %295
        %297 = vrot.lane.b32.xlu0 %v254, 1
        %v298 = vpop.permute.xlu0 %297
        %299 = vrot.lane.b32.xlu0 %v255, 1
        %v300 = vpop.permute.xlu0 %299
        %301 = vrot.lane.b32.xlu0 %v256, 1
        %v302 = vpop.permute.xlu0 %301
        %303 = vrot.lane.b32.xlu0 %v257, 1
        %v304 = vpop.permute.xlu0 %303
        %305 = vrot.lane.b32.xlu0 %v258, 1
        %v306 = vpop.permute.xlu0 %305
        %vm315 = vcmask 7168
        %v316 = vsel %vm315, %v268, %v292
        %v317 = vsel %vm315, %v270, %v294
        %v318 = vsel %vm315, %v272, %v296
        %v319 = vsel %vm315, %v274, %v298
        %v320 = vsel %vm315, %v276, %v300
        %v321 = vsel %vm315, %v278, %v302
        %v322 = vsel %vm315, %v280, %v304
        %v323 = vsel %vm315, %v282, %v306
        %vm324 = vcmask 121856
        %v325 = vsel %vm324, %v268, %v292
        %v326 = vsel %vm324, %v270, %v294
        %v327 = vsel %vm324, %v272, %v296
        %v328 = vsel %vm324, %v274, %v298
        %v329 = vsel %vm324, %v276, %v300
        %v330 = vsel %vm324, %v278, %v302
        %v331 = vsel %vm324, %v280, %v304
        %v332 = vsel %vm324, %v282, %v306
        %vm333 = vcmask 130048
        %v334 = vsel %vm333, %v251, 0.0
        %335 = vadd.xlane.f32.xlu0 %v334
        %v336 = vpop.xlane.xlu0 %335
        %v337 = vsel %vm333, %v252, 0.0
        %338 = vadd.xlane.f32.xlu0 %v337
        %v339 = vpop.xlane.xlu0 %338
        %v340 = vsel %vm333, %v253, 0.0
        %341 = vadd.xlane.f32.xlu0 %v340
        %v342 = vpop.xlane.xlu0 %341
        %v343 = vsel %vm333, %v254, 0.0
        %344 = vadd.xlane.f32.xlu0 %v343
        %v345 = vpop.xlane.xlu0 %344
        %v346 = vsel %vm333, %v255, 0.0
        %347 = vadd.xlane.f32.xlu0 %v346
        %v348 = vpop.xlane.xlu0 %347
        %v349 = vsel %vm333, %v256, 0.0
        %350 = vadd.xlane.f32.xlu0 %v349
        %v351 = vpop.xlane.xlu0 %350
        %v352 = vsel %vm333, %v257, 0.0
        %353 = vadd.xlane.f32.xlu0 %v352
        %v354 = vpop.xlane.xlu0 %353
        %v355 = vsel %vm333, %v258, 0.0
        %356 = vadd.xlane.f32.xlu0 %v355
        %v357 = vpop.xlane.xlu0 %356
        %v358 = vrcp.pop 16.0
        %v359 = vmul.f32 %v336, %v358
        %v360 = vmul.f32 %v339, %v358
        %v361 = vmul.f32 %v342, %v358
        %v362 = vmul.f32 %v345, %v358
        %v363 = vmul.f32 %v348, %v358
        %v364 = vmul.f32 %v351, %v358
        %v365 = vmul.f32 %v354, %v358
        %v366 = vmul.f32 %v357, %v358
        %s367 = smul.u32 %s20, 4
        %s368 = smul.u32 %s21, 4
        %s369 = sadd.s32 %s367, %s368
        %s370 = smul.u32 %s369, 5
        %s371 = sld [smem:[#allocation2 + %s370]]
        %v372 = vstv %s371
        %v373 = vmul.f32 %v372, %v316
        %v374 = vmul.f32 %v372, %v317
        %s375 = sadd.s32 %s370, 1
        %s376 = sld [smem:[#allocation2 + %s375]]
        %v377 = vstv %s376
        %v378 = vmul.f32 %v377, %v251
        %v379 = vmul.f32 %v377, %v252
        %v380 = vadd.f32 %v373, %v378
        %v381 = vadd.f32 %v374, %v379
        %s382 = sadd.s32 %s370, 2
        %s383 = sld [smem:[#allocation2 + %s382]]
        %v384 = vstv %s383
        %v385 = vmul.f32 %v384, %v325
        %v386 = vmul.f32 %v384, %v326
        %v387 = vadd.f32 %v380, %v385
        %v388 = vadd.f32 %v381, %v386
        %s389 = sadd.s32 %s370, 3
        %s390 = sld [smem:[#allocation2 + %s389]]
        %v391 = vstv %s390
        %v392 = vmul.f32 %v391, %v359
        %v393 = vmul.f32 %v391, %v360
        %v394 = vadd.f32 %v387, %v392
        %v395 = vadd.f32 %v388, %v393
        %s396 = sadd.s32 %s370, 4
        %s397 = sld [smem:[#allocation2 + %s396]]
        %v398 = vstv %s397
        %v399 = vmul.f32 %v398, %v251
        %v400 = vmul.f32 %v398, %v252
        %v401 = vadd.f32 %v394, %v399
        %v402 = vadd.f32 %v395, %v400
        %403 = vst.msk [vmem:[%s240] sm:$0xff] %vm333, %v401
        %404 = vst.msk [vmem:[%s240 + $0x8] sm:$0xff] %vm333, %v402
        %v405 = vsel %vm333, %v401, 0.0
        %v406 = vsel %vm333, %v402, 0.0
        %v407 = vadd.f32 %v405, %v406
        %408 = vadd.xlane.f32.xlu0 %v407
        %v409 = vpop.xlane.xlu0 %408
        %v410 = vrot.slane %v409, 4
        %v411 = vadd.f32 %v409, %v410
        %v412 = vrot.slane %v411, 2
        %v413 = vadd.f32 %v411, %v412
        %v414 = vrot.slane %v413, 1
        %v415 = vadd.f32 %v413, %v414
        %s416 = vtos %v415
        %v417 = vstv %s416
        %v418 = vrcp.pop 256.0
        %v419 = vmul.f32 %v417, %v418
        %vm420 = vcmask 0
        %421 = vst.msk [vmem:[%s249] sm:$0x1] %vm420, %v419
        %s422 = sadd.s32 %s370, 5
        %s423 = sld [smem:[#allocation2 + %s422]]
        %v424 = vstv %s423
        %v425 = vmul.f32 %v424, %v318
        %v426 = vmul.f32 %v424, %v319
        %s427 = sadd.s32 %s370, 6
        %s428 = sld [smem:[#allocation2 + %s427]]
        %v429 = vstv %s428
        %v430 = vmul.f32 %v429, %v253
        %v431 = vmul.f32 %v429, %v254
        %v432 = vadd.f32 %v425, %v430
        %v433 = vadd.f32 %v426, %v431
        %s434 = sadd.s32 %s370, 7
        %s435 = sld [smem:[#allocation2 + %s434]]
        %v436 = vstv %s435
        %v437 = vmul.f32 %v436, %v327
        %v438 = vmul.f32 %v436, %v328
        %v439 = vadd.f32 %v432, %v437
        %v440 = vadd.f32 %v433, %v438
        %s441 = sadd.s32 %s370, 8
        %s442 = sld [smem:[#allocation2 + %s441]]
        %v443 = vstv %s442
        %v444 = vmul.f32 %v443, %v361
        %v445 = vmul.f32 %v443, %v362
        %v446 = vadd.f32 %v439, %v444
        %v447 = vadd.f32 %v440, %v445
        %s448 = sadd.s32 %s370, 9
        %s449 = sld [smem:[#allocation2 + %s448]]
        %v450 = vstv %s449
        %v451 = vmul.f32 %v450, %v253
        %v452 = vmul.f32 %v450, %v254
        %v453 = vadd.f32 %v446, %v451
        %v454 = vadd.f32 %v447, %v452
        %s455 = scalar_lea.vmem %s240, 16
        %456 = vst.msk [vmem:[%s455] sm:$0xff] %vm333, %v453
        %457 = vst.msk [vmem:[%s455 + $0x8] sm:$0xff] %vm333, %v454
        %v458 = vsel %vm333, %v453, 0.0
        %v459 = vsel %vm333, %v454, 0.0
        %v460 = vadd.f32 %v458, %v459
        %461 = vadd.xlane.f32.xlu0 %v460
        %v462 = vpop.xlane.xlu0 %461
        %v463 = vrot.slane %v462, 4
        %v464 = vadd.f32 %v462, %v463
        %v465 = vrot.slane %v464, 2
        %v466 = vadd.f32 %v464, %v465
        %v467 = vrot.slane %v466, 1
        %v468 = vadd.f32 %v466, %v467
        %s469 = vtos %v468
        %v470 = vstv %s469
        %v471 = vmul.f32 %v470, %v418
        %s472 = scalar_lea.vmem %s249, 1
        %473 = vst.msk [vmem:[%s472] sm:$0x1] %vm420, %v471
        %s474 = sadd.s32 %s370, 10
        %s475 = sld [smem:[#allocation2 + %s474]]
        %v476 = vstv %s475
        %v477 = vmul.f32 %v476, %v320
        %v478 = vmul.f32 %v476, %v321
        %s479 = sadd.s32 %s370, 11
        %s480 = sld [smem:[#allocation2 + %s479]]
        %v481 = vstv %s480
        %v482 = vmul.f32 %v481, %v255
        %v483 = vmul.f32 %v481, %v256
        %v484 = vadd.f32 %v477, %v482
        %v485 = vadd.f32 %v478, %v483
        %s486 = sadd.s32 %s370, 12
        %s487 = sld [smem:[#allocation2 + %s486]]
        %v488 = vstv %s487
        %v489 = vmul.f32 %v488, %v329
        %v490 = vmul.f32 %v488, %v330
        %v491 = vadd.f32 %v484, %v489
        %v492 = vadd.f32 %v485, %v490
        %s493 = sadd.s32 %s370, 13
        %s494 = sld [smem:[#allocation2 + %s493]]
        %v495 = vstv %s494
        %v496 = vmul.f32 %v495, %v363
        %v497 = vmul.f32 %v495, %v364
        %v498 = vadd.f32 %v491, %v496
        %v499 = vadd.f32 %v492, %v497
        %s500 = sadd.s32 %s370, 14
        %s501 = sld [smem:[#allocation2 + %s500]]
        %v502 = vstv %s501
        %v503 = vmul.f32 %v502, %v255
        %v504 = vmul.f32 %v502, %v256
        %v505 = vadd.f32 %v498, %v503
        %v506 = vadd.f32 %v499, %v504
        %s507 = scalar_lea.vmem %s240, 32
        %508 = vst.msk [vmem:[%s507] sm:$0xff] %vm333, %v505
        %509 = vst.msk [vmem:[%s507 + $0x8] sm:$0xff] %vm333, %v506
        %v510 = vsel %vm333, %v505, 0.0
        %v511 = vsel %vm333, %v506, 0.0
        %v512 = vadd.f32 %v510, %v511
        %513 = vadd.xlane.f32.xlu0 %v512
        %v514 = vpop.xlane.xlu0 %513
        %v515 = vrot.slane %v514, 4
        %v516 = vadd.f32 %v514, %v515
        %v517 = vrot.slane %v516, 2
        %v518 = vadd.f32 %v516, %v517
        %v519 = vrot.slane %v518, 1
        %v520 = vadd.f32 %v518, %v519
        %s521 = vtos %v520
        %v522 = vstv %s521
        %v523 = vmul.f32 %v522, %v418
        %s524 = scalar_lea.vmem %s249, 2
        %525 = vst.msk [vmem:[%s524] sm:$0x1] %vm420, %v523
        %s526 = sadd.s32 %s370, 15
        %s527 = sld [smem:[#allocation2 + %s526]]
        %v528 = vstv %s527
        %v529 = vmul.f32 %v528, %v322
        %v530 = vmul.f32 %v528, %v323
        %s531 = sadd.s32 %s370, 16
        %s532 = sld [smem:[#allocation2 + %s531]]
        %v533 = vstv %s532
        %v534 = vmul.f32 %v533, %v257
        %v535 = vmul.f32 %v533, %v258
        %v536 = vadd.f32 %v529, %v534
        %v537 = vadd.f32 %v530, %v535
        %s538 = sadd.s32 %s370, 17
        %s539 = sld [smem:[#allocation2 + %s538]]
        %v540 = vstv %s539
        %v541 = vmul.f32 %v540, %v331
        %v542 = vmul.f32 %v540, %v332
        %v543 = vadd.f32 %v536, %v541
        %v544 = vadd.f32 %v537, %v542
        %s545 = sadd.s32 %s370, 18
        %s546 = sld [smem:[#allocation2 + %s545]]
        %v547 = vstv %s546
        %v548 = vmul.f32 %v547, %v365
        %v549 = vmul.f32 %v547, %v366
        %v550 = vadd.f32 %v543, %v548
        %v551 = vadd.f32 %v544, %v549
        %s552 = sadd.s32 %s370, 19
        %s553 = sld [smem:[#allocation2 + %s552]]
        %v554 = vstv %s553
        %v555 = vmul.f32 %v554, %v257
        %v556 = vmul.f32 %v554, %v258
        %v557 = vadd.f32 %v550, %v555
        %v558 = vadd.f32 %v551, %v556
        %s559 = scalar_lea.vmem %s240, 48
        %560 = vst.msk [vmem:[%s559] sm:$0xff] %vm333, %v557
        %561 = vst.msk [vmem:[%s559 + $0x8] sm:$0xff] %vm333, %v558
        %v562 = vsel %vm333, %v557, 0.0
        %v563 = vsel %vm333, %v558, 0.0
        %v564 = vadd.f32 %v562, %v563
        %565 = vadd.xlane.f32.xlu0 %v564
        %v566 = vpop.xlane.xlu0 %565
        %v567 = vrot.slane %v566, 4
        %v568 = vadd.f32 %v566, %v567
        %v569 = vrot.slane %v568, 2
        %v570 = vadd.f32 %v568, %v569
        %v571 = vrot.slane %v570, 1
        %v572 = vadd.f32 %v570, %v571
        %s573 = vtos %v572
        %v574 = vstv %s573
        %v575 = vmul.f32 %v574, %v418
        %s576 = scalar_lea.vmem %s249, 3
        %577 = vst.msk [vmem:[%s576] sm:$0x1] %vm420, %v575
        %s578 = smul.u32 4, %s21
        %p579 = scmp.lt.s32.totalorder %s20, 1
        %s580 = scalar_select %p579, %s20, 1
        %p581 = scmp.lt.s32.totalorder %s578, 3
        %s582 = scalar_select %p581, %s578, 3
        %s583 = smul.addr %s582, 2
        %s584 = smul.addr %s580, 8
        %s585 = sadd.s32 %s583, %s584
        %s586 = smul.addr %s585, 8
        %s587 = scalar_lea.vmem %s2, %s586
        %s588 = smul.u32 4, %s21
        %p589 = scmp.lt.s32.totalorder %s20, 1
        %s590 = scalar_select %p589, %s20, 1
        %p591 = scmp.lt.s32.totalorder %s588, 3
        %s592 = scalar_select %p591, %s588, 3
        %s593 = smul.addr %s590, 4
        %s594 = sadd.s32 %s592, %s593
        %s595 = scalar_lea.vmem %s3, %s594
        // Predicated region
        $region33: #{cubic_attention.2} parent=27 // pred_check
          %p596 = pneg %p97
        $region34: #{cubic_attention.2} parent=27 // pred_check_branch
          %598 = sbr.rel (%p596) target = $region36
        $region35: #{cubic_attention.2} parent=27 // pred_region
          %s599 = smul.u32 4, %s21
        $region36: #{cubic_attention.2} parent=27 // pred_fallthru
          _
        // Predicated region
        $region37: #{cubic_attention.2} parent=27 // pred_check
          %p600 = pneg %p125
        $region38: #{cubic_attention.2} parent=27 // pred_check_branch
          %602 = sbr.rel (%p600) target = $region40
        $region39: #{cubic_attention.2} parent=27 // pred_region
          %s603 = smul.u32 4, %s21
        $region40: #{cubic_attention.2} parent=27 // pred_fallthru
          _
      $region28: #{cubic_attention.2} parent=5 // pred_fallthru
        _
      %p604 = scmp.le.s32.totalorder 2, %s11
      // Predicated region
      $region41: #{cubic_attention.2} parent=5 // pred_check
        %p605 = pneg %p604
      $region42: #{cubic_attention.2} parent=5 // pred_check_branch
        %607 = sbr.rel (%p605) target = $region44
      $region43: #{cubic_attention.2} parent=5 // pred_region
        %s608 = ssub.s32 %s11, 2
        // Predicated region
        $region45: #{cubic_attention.2} parent=43 // pred_check
          %p609 = pneg %p103
        $region46: #{cubic_attention.2} parent=43 // pred_check_branch
          %611 = sbr.rel (%p609) target = $region48
        $region47: #{cubic_attention.2} parent=43 // pred_region
          %s612 = smul.u32 4, %s23
          %p613 = scmp.lt.s32.totalorder %s22, 1
          %s614 = scalar_select %p613, %s22, 1
          %p615 = scmp.lt.s32.totalorder %s612, 3
          %s616 = scalar_select %p615, %s612, 3
          %s617 = smul.addr %s616, 2
          %s618 = smul.addr %s614, 8
          %s619 = sadd.s32 %s617, %s618
          %s620 = smul.addr %s619, 8
          %s621 = scalar_lea.vmem %s2, %s620
        $region48: #{cubic_attention.2} parent=43 // pred_fallthru
          _
        // Predicated region
        $region49: #{cubic_attention.2} parent=43 // pred_check
          %p622 = pneg %p131
        $region50: #{cubic_attention.2} parent=43 // pred_check_branch
          %624 = sbr.rel (%p622) target = $region52
        $region51: #{cubic_attention.2} parent=43 // pred_region
          %s625 = smul.u32 4, %s23
          %p626 = scmp.lt.s32.totalorder %s22, 1
          %s627 = scalar_select %p626, %s22, 1
          %p628 = scmp.lt.s32.totalorder %s625, 3
          %s629 = scalar_select %p628, %s625, 3
          %s630 = smul.addr %s627, 4
          %s631 = sadd.s32 %s629, %s630
          %s632 = scalar_lea.vmem %s3, %s631
        $region52: #{cubic_attention.2} parent=43 // pred_fallthru
          _
      $region44: #{cubic_attention.2} parent=5 // pred_fallthru
        _
    $region6: #{cubic_attention.2} parent=1 // loop_footer
      %s15 = sadd.s32 1, %s11
    $region7: #{cubic_attention.2} parent=1 // loop_footer_branch
      %10 = sbr.rel target = $region3
    $region8: #{cubic_attention.2} parent=1 // loop_exit
      _
    %633 = vsyncpa [#allocation3], 1
    %s634 = scalar_lea.sflag [#allocation3], 1
    %635 = vsyncpa %s634, 1

// kernel: cubic_attention.3
$region0: #{cubic_attention.3}
  #allocation0 [shape = 'u32[]', space=smem, size = 0x4, offset = 0x4, fixed_abs, tag = 'smem constant byte address 0x4 - core index']
  #allocation1 [shape = 'u32[144,128]{1,0:T(1,128)}', space=vmem, size = 0x12000, scoped, tag = 'internal scratch']
  %s0 = inlined_call_operand.vmem [shape: f32[48], index: 0, kind: input, shape index: {}]
  %s1 = inlined_call_operand.vmem [shape: f32[2,4,16,16], index: 1, kind: input, shape index: {}]
  %s2 = inlined_call_operand.vmem [shape: f32[2,4,16,16], index: 2, kind: input, shape index: {}]
  %s3 = inlined_call_operand.hbm [shape: f32[2,4,16,16], index: 3, kind: output, shape index: {}]
  %s4 = sld [smem:[#allocation0]]
  $region49: #{cubic_attention.3} parent=0
    _
  %s6 = ssub.s32 1, %s4
  %s7 = scalar_select 0, %s6, %s4
  $region1: #{cubic_attention.3} parent=0
    #allocation2 [shape = 'u8[512]{0}', space=smem, size = 0x200, scoped, tag = 'input window, operand 0, single buffered']
    #allocation3 [shape = 's32[2]{0}', space=sflag, size = 0x8, scoped, tag = 'scoped memory for cubic_attention.3']
    #allocation4 [shape = 's32[2]{0}', space=sflag, size = 0x8, scoped, tag = 'scoped memory for cubic_attention.3']
    #allocation5 [shape = 'u8[65536]{0}', space=vmem, size = 0x10000, scoped, tag = 'output window, operand 0']
    %8 = vsyncpa [#allocation4], 0
    %9 = vsyncpa [#allocation3], 0
    %s10 = scalar_lea.sflag [#allocation3], 1
    %11 = vsyncpa %s10, 0
    loop: start=0, step=1, limit=4
    $region2: #{cubic_attention.3} parent=1 // loop_pre_header
      _
    $region3: #{cubic_attention.3} parent=1 // loop_header
      %s13 = sphi 0, %s17
      %p14 = scmp.ge.s32.totalorder %s13, 4
      %s20 = sphi 0, %s32
      %s21 = sphi 0, %s28
      %s22 = sphi 0, %s20
      %s23 = sphi 0, %s21
      %s24 = sphi 0, %s22
      %s25 = sphi 0, %s23
      %s33 = sphi 0, %s33
      %s35 = sphi 0, %s33
      %s36 = sphi 0, %s35
      %s50 = sphi 0, %s36
      %s58 = sphi 0, %s60
      %s61 = sphi 0, %s58
      %s62 = sphi 0, %s61
      %s78 = sphi 0, %s62
      %s86 = sphi 0, %s88
      %s89 = sphi 0, %s86
      %s90 = sphi 0, %s89
      %s106 = sphi 0, %s90
      %s114 = sphi 0, %s116
      %s117 = sphi 0, %s114
      %s118 = sphi 0, %s117
      %s134 = sphi 0, %s118
    $region4: #{cubic_attention.3} parent=1 // loop_header_branch
      %16 = sbr.rel (%p14) target = $region8
    $region5: #{cubic_attention.3} parent=1 // loop_body
      %s18 = ssub.s32 %s13, 1
      %s19 = ssub.s32 %s13, 2
      %s26 = sadd.s32 1, %s21
      %p27 = scmp.ge.s32.totalorder %s26, 1
      %s28 = scalar_select %p27, 0, %s26
      %s29 = sadd.s32 1, %s20
      %s30 = scalar_select %p27, %s29, %s20
      %p31 = scmp.ge.s32.totalorder %s30, 2
      %s32 = scalar_select %p31, 0, %s30
      %s34 = sadd.s32 %s33, 1
      %p37 = scmp.eq.s32.totalorder %s13, 1
      %p38 = scmp.ne.s32.totalorder %s33, %s35
      %p39 = scmp.eq.s32.totalorder %s13, 0
      %p40 = por %p38, %p39
      %p41 = scmp.ne.s32.totalorder %s33, %s35
      %p42 = scmp.eq.s32.totalorder %s18, 1
      %p43 = por %p41, %p42
      %p44 = scmp.ne.s32.totalorder %s35, %s36
      %p45 = scmp.eq.s32.totalorder %s18, 0
      %p46 = por %p44, %p45
      %p47 = scmp.ne.s32.totalorder %s35, %s36
      %p48 = scmp.eq.s32.totalorder %s19, 1
      %p49 = por %p47, %p48
      %p51 = scmp.ne.s32.totalorder %s36, %s50
      %p52 = scmp.eq.s32.totalorder %s19, 0
      %p53 = por %p51, %p52
      %s54 = ssub.s32 %s20, %s32
      %s55 = ssub.s32 %s21, %s28
      %s56 = sor.u32 %s54, %s55
      %p57 = scmp.eq.s32.totalorder %s56, 0
      %s59 = sadd.s32 %s58, 1
      %s60 = scalar_select %p57, %s58, %s59
      %p63 = pneg %p57
      %p64 = scmp.eq.s32.totalorder %s13, 1
      %p65 = por %p63, %p64
      %p66 = scmp.ne.s32.totalorder %s58, %s61
      %p67 = scmp.eq.s32.totalorder %s13, 0
      %p68 = por %p66, %p67
      %p69 = scmp.ne.s32.totalorder %s58, %s61
      %p70 = scmp.eq.s32.totalorder %s18, 1
      %p71 = por %p69, %p70
      %p72 = scmp.ne.s32.totalorder %s61, %s62
      %p73 = scmp.eq.s32.totalorder %s18, 0
      %p74 = por %p72, %p73
      %p75 = scmp.ne.s32.totalorder %s61, %s62
      %p76 = scmp.eq.s32.totalorder %s19, 1
      %p77 = por %p75, %p76
      %p79 = scmp.ne.s32.totalorder %s62, %s78
      %p80 = scmp.eq.s32.totalorder %s19, 0
      %p81 = por %p79, %p80
      %s82 = ssub.s32 %s20, %s32
      %s83 = ssub.s32 %s21, %s28
      %s84 = sor.u32 %s82, %s83
      %p85 = scmp.eq.s32.totalorder %s84, 0
      %s87 = sadd.s32 %s86, 1
      %s88 = scalar_select %p85, %s86, %s87
      %p91 = pneg %p85
      %p92 = scmp.eq.s32.totalorder %s13, 1
      %p93 = por %p91, %p92
      %p94 = scmp.ne.s32.totalorder %s86, %s89
      %p95 = scmp.eq.s32.totalorder %s13, 0
      %p96 = por %p94, %p95
      %p97 = scmp.ne.s32.totalorder %s86, %s89
      %p98 = scmp.eq.s32.totalorder %s18, 1
      %p99 = por %p97, %p98
      %p100 = scmp.ne.s32.totalorder %s89, %s90
      %p101 = scmp.eq.s32.totalorder %s18, 0
      %p102 = por %p100, %p101
      %p103 = scmp.ne.s32.totalorder %s89, %s90
      %p104 = scmp.eq.s32.totalorder %s19, 1
      %p105 = por %p103, %p104
      %p107 = scmp.ne.s32.totalorder %s90, %s106
      %p108 = scmp.eq.s32.totalorder %s19, 0
      %p109 = por %p107, %p108
      %s110 = ssub.s32 %s20, %s32
      %s111 = ssub.s32 %s21, %s28
      %s112 = sor.u32 %s110, %s111
      %p113 = scmp.eq.s32.totalorder %s112, 0
      %s115 = sadd.s32 %s114, 1
      %s116 = scalar_select %p113, %s114, %s115
      %p119 = pneg %p113
      %p120 = scmp.eq.s32.totalorder %s13, 1
      %p121 = por %p119, %p120
      %p122 = scmp.ne.s32.totalorder %s114, %s117
      %p123 = scmp.eq.s32.totalorder %s13, 0
      %p124 = por %p122, %p123
      %p125 = scmp.ne.s32.totalorder %s114, %s117
      %p126 = scmp.eq.s32.totalorder %s18, 1
      %p127 = por %p125, %p126
      %p128 = scmp.ne.s32.totalorder %s117, %s118
      %p129 = scmp.eq.s32.totalorder %s18, 0
      %p130 = por %p128, %p129
      %p131 = scmp.ne.s32.totalorder %s117, %s118
      %p132 = scmp.eq.s32.totalorder %s19, 1
      %p133 = por %p131, %p132
      %p135 = scmp.ne.s32.totalorder %s118, %s134
      %p136 = scmp.eq.s32.totalorder %s19, 0
      %p137 = por %p135, %p136
      %p138 = scmp.le.s32.totalorder 1, %s13
      %p139 = scmp.lt.s32.totalorder %s13, 3
      %p140 = pnand %p138, %p139
      %p141 = pneg %p140
      // Predicated region
      $region9: #{cubic_attention.3} parent=5 // pred_check
        _
      $region10: #{cubic_attention.3} parent=5 // pred_check_branch
        %143 = sbr.rel (%p140) target = $region12
      $region11: #{cubic_attention.3} parent=5 // pred_region
        %s144 = ssub.s32 %s13, 1
        // Predicated region
        $region13: #{cubic_attention.3} parent=11 // pred_check
          %p145 = pneg %p46
        $region14: #{cubic_attention.3} parent=11 // pred_check_branch
          %147 = sbr.rel (%p145) target = $region16
        $region15: #{cubic_attention.3} parent=11 // pred_region
          %s149 = ssub.s32 16, 16
          %150 = vsyncadd [#allocation4], %s149
          %s152 = sshll.u32 %s0, 4
          %s153 = int_to_ptr.vmem [resolvable:$true] %s152
          %155 = dma.vmem_to_smem %s153, 16, [#allocation2], [#allocation4]
        $region16: #{cubic_attention.3} parent=11 // pred_fallthru
          _
      $region12: #{cubic_attention.3} parent=5 // pred_fallthru
        _
      %p156 = scmp.lt.s32.totalorder %s13, 2
      // Predicated region
      $region17: #{cubic_attention.3} parent=5 // pred_check
        %p157 = pneg %p156
      $region18: #{cubic_attention.3} parent=5 // pred_check_branch
        %159 = sbr.rel (%p157) target = $region20
      $region19: #{cubic_attention.3} parent=5 // pred_region
        // Predicated region
        $region21: #{cubic_attention.3} parent=19 // pred_check
          %p160 = pneg %p68
        $region22: #{cubic_attention.3} parent=19 // pred_check_branch
          %162 = sbr.rel (%p160) target = $region24
        $region23: #{cubic_attention.3} parent=19 // pred_region
          %s163 = smul.u32 4, %s21
          %p164 = scmp.lt.s32.totalorder %s20, 1
          %s165 = scalar_select %p164, %s20, 1
          %p166 = scmp.lt.s32.totalorder %s163, 3
          %s167 = scalar_select %p166, %s163, 3
          %s168 = smul.addr %s167, 2
          %s169 = smul.addr %s165, 8
          %s170 = sadd.s32 %s168, %s169
          %s171 = smul.addr %s170, 8
          %s172 = scalar_lea.vmem %s1, %s171
          %s173 = smul.u32 4, %s21
        $region24: #{cubic_attention.3} parent=19 // pred_fallthru
          _
        // Predicated region
        $region25: #{cubic_attention.3} parent=19 // pred_check
          %p174 = pneg %p96
        $region26: #{cubic_attention.3} parent=19 // pred_check_branch
          %176 = sbr.rel (%p174) target = $region28
        $region27: #{cubic_attention.3} parent=19 // pred_region
          %s177 = smul.u32 4, %s21
          %p178 = scmp.lt.s32.totalorder %s20, 1
          %s179 = scalar_select %p178, %s20, 1
          %p180 = scmp.lt.s32.totalorder %s177, 3
          %s181 = scalar_select %p180, %s177, 3
          %s182 = smul.addr %s181, 2
          %s183 = smul.addr %s179, 8
          %s184 = sadd.s32 %s182, %s183
          %s185 = smul.addr %s184, 8
          %s186 = scalar_lea.vmem %s2, %s185
          %s187 = smul.u32 4, %s21
        $region28: #{cubic_attention.3} parent=19 // pred_fallthru
          _
      $region20: #{cubic_attention.3} parent=5 // pred_fallthru
        _
      %p188 = scmp.le.s32.totalorder 1, %s13
      %p189 = scmp.lt.s32.totalorder %s13, 3
      %p190 = pnand %p188, %p189
      %p191 = pneg %p190
      // Predicated region
      $region29: #{cubic_attention.3} parent=5 // pred_check
        _
      $region30: #{cubic_attention.3} parent=5 // pred_check_branch
        %193 = sbr.rel (%p190) target = $region32
      $region31: #{cubic_attention.3} parent=5 // pred_region
        %s194 = ssub.s32 %s13, 1
        // Predicated region
        $region33: #{cubic_attention.3} parent=31 // pred_check
          %p195 = pneg %p46
        $region34: #{cubic_attention.3} parent=31 // pred_check_branch
          %197 = sbr.rel (%p195) target = $region36
        $region35: #{cubic_attention.3} parent=31 // pred_region
          %198 = dma.done [#allocation4], 16
        $region36: #{cubic_attention.3} parent=31 // pred_fallthru
          _
        %199 = sfence
        %p200 = pneg %p46
        %p201 = pneg %p43
        %s202 = smul.u32 4, %s23
        %p203 = scmp.lt.s32.totalorder %s22, 1
        %s204 = scalar_select %p203, %s22, 1
        %p205 = scmp.lt.s32.totalorder %s202, 3
        %s206 = scalar_select %p205, %s202, 3
        %s207 = smul.addr %s206, 2
        %s208 = smul.addr %s204, 8
        %s209 = sadd.s32 %s207, %s208
        %s210 = smul.addr %s209, 8
        %s211 = scalar_lea.vmem %s1, %s210
        %p212 = pneg %p74
        %p213 = pneg %p71
        %s214 = smul.u32 4, %s23
        %p215 = scmp.lt.s32.totalorder %s22, 1
        %s216 = scalar_select %p215, %s22, 1
        %p217 = scmp.lt.s32.totalorder %s214, 3
        %s218 = scalar_select %p217, %s214, 3
        %s219 = smul.addr %s218, 2
        %s220 = smul.addr %s216, 8
        %s221 = sadd.s32 %s219, %s220
        %s222 = smul.addr %s221, 8
        %s223 = scalar_lea.vmem %s2, %s222
        %p224 = pneg %p102
        %p225 = pneg %p99
        %p226 = pneg %p130
        %p227 = pneg %p127
        %s228 = sand.u32 %s117, 1
        %s229 = scalar_lea.sflag [#allocation3], %s228
        %s230 = sand.u32 %s117, 1
        %s231 = smul.addr %s230, 64
        %s232 = scalar_lea.vmem [#allocation5], %s231
        %s233 = smul.u32 4, %s23
        %p234 = scmp.lt.s32.totalorder %s22, 1
        %s235 = scalar_select %p234, %s22, 1
        %p236 = scmp.lt.s32.totalorder %s233, 3
        %s237 = scalar_select %p236, %s233, 3
        %s238 = smul.addr %s237, 2
        %s239 = smul.addr %s235, 8
        %s240 = sadd.s32 %s238, %s239
        %s241 = smul.addr %s240, 8
        %s242 = scalar_lea.vmem %s1, %s241
        %s243 = smul.u32 4, %s23
        %s244 = smul.u32 4, %s23
        %p245 = scmp.lt.s32.totalorder %s22, 1
        %s246 = scalar_select %p245, %s22, 1
        %p247 = scmp.lt.s32.totalorder %s244, 3
        %s248 = scalar_select %p247, %s244, 3
        %s249 = smul.addr %s248, 2
        %s250 = smul.addr %s246, 8
        %s251 = sadd.s32 %s249, %s250
        %s252 = smul.addr %s251, 8
        %s253 = scalar_lea.vmem %s2, %s252
        %s254 = smul.u32 4, %s23
        %s255 = smul.u32 4, %s23
        %v256 = vld [vmem:[%s242] sm:$0xff]
        %v257 = vld [vmem:[%s242 + $0x8] sm:$0xff]
        %v258 = vld [vmem:[%s242 + $0x10] sm:$0xff]
        %v259 = vld [vmem:[%s242 + $0x18] sm:$0xff]
        %v260 = vld [vmem:[%s242 + $0x20] sm:$0xff]
        %v261 = vld [vmem:[%s242 + $0x28] sm:$0xff]
        %v262 = vld [vmem:[%s242 + $0x30] sm:$0xff]
        %v263 = vld [vmem:[%s242 + $0x38] sm:$0xff]
        %v264 = vld [vmem:[%s253] sm:$0xff]
        %v265 = vld [vmem:[%s253 + $0x8] sm:$0xff]
        %v266 = vld [vmem:[%s253 + $0x10] sm:$0xff]
        %v267 = vld [vmem:[%s253 + $0x18] sm:$0xff]
        %v268 = vld [vmem:[%s253 + $0x20] sm:$0xff]
        %v269 = vld [vmem:[%s253 + $0x28] sm:$0xff]
        %v270 = vld [vmem:[%s253 + $0x30] sm:$0xff]
        %v271 = vld [vmem:[%s253 + $0x38] sm:$0xff]
        %v276 = vrot.slane %v256, 1
        %v277 = vrot.slane %v258, 1
        %v278 = vrot.slane %v260, 1
        %v279 = vrot.slane %v262, 1
        %vm288 = vcmask 1040384
        %v289 = vrot.slane %v256, 7
        %v290 = vrot.slane %v257, 7
        %v291 = vsel %vm288, %v289, %v290
        %v292 = vrot.slane %v258, 7
        %v293 = vrot.slane %v259, 7
        %v294 = vsel %vm288, %v292, %v293
        %v295 = vrot.slane %v260, 7
        %v296 = vrot.slane %v261, 7
        %v297 = vsel %vm288, %v295, %v296
        %v298 = vrot.slane %v262, 7
        %v299 = vrot.slane %v263, 7
        %v300 = vsel %vm288, %v298, %v299
        %v309 = vsel %vm288, %v276, %v289
        %v310 = vsel %vm288, %v277, %v292
        %v311 = vsel %vm288, %v278, %v295
        %v312 = vsel %vm288, %v279, %v298
        %vm313 = vcmask 1046528
        %v314 = vrot.slane %v257, 1
        %v315 = vsel %vm313, %v276, %v314
        %v316 = vrot.slane %v259, 1
        %v317 = vsel %vm313, %v277, %v316
        %v318 = vrot.slane %v261, 1
        %v319 = vsel %vm313, %v278, %v318
        %v320 = vrot.slane %v263, 1
        %v321 = vsel %vm313, %v279, %v320
        %v334 = vsel %vm313, %v314, %v290
        %v335 = vsel %vm313, %v316, %v293
        %v336 = vsel %vm313, %v318, %v296
        %v337 = vsel %vm313, %v320, %v299
        %vm338 = vcmask 130048
        %v339 = vsel %vm338, %v256, 0.0
        %v340 = vsel %vm338, %v257, 0.0
        %v341 = vadd.f32 %v339, %v340
        %v342 = vrot.slane %v341, 4
        %v343 = vadd.f32 %v341, %v342
        %v344 = vrot.slane %v343, 2
        %v345 = vadd.f32 %v343, %v344
        %v346 = vrot.slane %v345, 1
        %v347 = vadd.f32 %v345, %v346
        %v348 = vsel %vm338, %v258, 0.0
        %v349 = vsel %vm338, %v259, 0.0
        %v350 = vadd.f32 %v348, %v349
        %v351 = vrot.slane %v350, 4
        %v352 = vadd.f32 %v350, %v351
        %v353 = vrot.slane %v352, 2
        %v354 = vadd.f32 %v352, %v353
        %v355 = vrot.slane %v354, 1
        %v356 = vadd.f32 %v354, %v355
        %v357 = vsel %vm338, %v260, 0.0
        %v358 = vsel %vm338, %v261, 0.0
        %v359 = vadd.f32 %v357, %v358
        %v360 = vrot.slane %v359, 4
        %v361 = vadd.f32 %v359, %v360
        %v362 = vrot.slane %v361, 2
        %v363 = vadd.f32 %v361, %v362
        %v364 = vrot.slane %v363, 1
        %v365 = vadd.f32 %v363, %v364
        %v366 = vsel %vm338, %v262, 0.0
        %v367 = vsel %vm338, %v263, 0.0
        %v368 = vadd.f32 %v366, %v367
        %v369 = vrot.slane %v368, 4
        %v370 = vadd.f32 %v368, %v369
        %v371 = vrot.slane %v370, 2
        %v372 = vadd.f32 %v370, %v371
        %v373 = vrot.slane %v372, 1
        %v374 = vadd.f32 %v372, %v373
        %v375 = vrcp.pop 16.0
        %v376 = vmul.f32 %v347, %v375
        %v377 = vmul.f32 %v356, %v375
        %v378 = vmul.f32 %v365, %v375
        %v379 = vmul.f32 %v374, %v375
        %s380 = smul.u32 %s22, 4
        %s381 = smul.u32 %s23, 4
        %s382 = sadd.s32 %s380, %s381
        %s383 = smul.u32 %s382, 6
        %s384 = sld [smem:[#allocation2 + %s383]]
        %v385 = vstv %s384
        %v386 = vmul.f32 %v385, %v309
        %v387 = vmul.f32 %v385, %v291
        %s388 = sadd.s32 %s383, 1
        %s389 = sld [smem:[#allocation2 + %s388]]
        %v390 = vstv %s389
        %v391 = vmul.f32 %v390, %v256
        %v392 = vmul.f32 %v390, %v257
        %v393 = vadd.f32 %v386, %v391
        %v394 = vadd.f32 %v387, %v392
        %s395 = sadd.s32 %s383, 2
        %s396 = sld [smem:[#allocation2 + %s395]]
        %v397 = vstv %s396
        %v398 = vmul.f32 %v397, %v315
        %v399 = vmul.f32 %v397, %v334
        %v400 = vadd.f32 %v393, %v398
        %v401 = vadd.f32 %v394, %v399
        %s402 = sadd.s32 %s383, 3
        %s403 = sld [smem:[#allocation2 + %s402]]
        %v404 = vstv %s403
        %v405 = vmul.f32 %v404, %v376
        %v406 = vadd.f32 %v400, %v405
        %v407 = vadd.f32 %v401, %v405
        %s408 = sadd.s32 %s383, 4
        %s409 = sld [smem:[#allocation2 + %s408]]
        %v410 = vstv %s409
        %v411 = vmul.f32 %v410, %v256
        %v412 = vmul.f32 %v410, %v257
        %v413 = vadd.f32 %v406, %v411
        %v414 = vadd.f32 %v407, %v412
        %s415 = sadd.s32 %s383, 5
        %s416 = sld [smem:[#allocation2 + %s415]]
        %v417 = vstv %s416
        %v418 = vmul.f32 %v417, %v264
        %v419 = vmul.f32 %v417, %v265
        %v420 = vadd.f32 %v413, %v418
        %v421 = vadd.f32 %v414, %v419
        %422 = vst.msk [vmem:[%s232] sm:$0xff] %vm338, %v420
        %423 = vst.msk [vmem:[%s232 + $0x8] sm:$0xff] %vm338, %v421
        %s424 = sadd.s32 %s383, 6
        %s425 = sld [smem:[#allocation2 + %s424]]
        %v426 = vstv %s425
        %v427 = vmul.f32 %v426, %v310
        %v428 = vmul.f32 %v426, %v294
        %s429 = sadd.s32 %s383, 7
        %s430 = sld [smem:[#allocation2 + %s429]]
        %v431 = vstv %s430
        %v432 = vmul.f32 %v431, %v258
        %v433 = vmul.f32 %v431, %v259
        %v434 = vadd.f32 %v427, %v432
        %v435 = vadd.f32 %v428, %v433
        %s436 = sadd.s32 %s383, 8
        %s437 = sld [smem:[#allocation2 + %s436]]
        %v438 = vstv %s437
        %v439 = vmul.f32 %v438, %v317
        %v440 = vmul.f32 %v438, %v335
        %v441 = vadd.f32 %v434, %v439
        %v442 = vadd.f32 %v435, %v440
        %s443 = sadd.s32 %s383, 9
        %s444 = sld [smem:[#allocation2 + %s443]]
        %v445 = vstv %s444
        %v446 = vmul.f32 %v445, %v377
        %v447 = vadd.f32 %v441, %v446
        %v448 = vadd.f32 %v442, %v446
        %s449 = sadd.s32 %s383, 10
        %s450 = sld [smem:[#allocation2 + %s449]]
        %v451 = vstv %s450
        %v452 = vmul.f32 %v451, %v258
        %v453 = vmul.f32 %v451, %v259
        %v454 = vadd.f32 %v447, %v452
        %v455 = vadd.f32 %v448, %v453
        %s456 = sadd.s32 %s383, 11
        %s457 = sld [smem:[#allocation2 + %s456]]
        %v458 = vstv %s457
        %v459 = vmul.f32 %v458, %v266
        %v460 = vmul.f32 %v458, %v267
        %v461 = vadd.f32 %v454, %v459
        %v462 = vadd.f32 %v455, %v460
        %s463 = scalar_lea.vmem %s232, 16 [#allocation5]
        %464 = vst.msk [vmem:[%s463] sm:$0xff] %vm338, %v461
        %465 = vst.msk [vmem:[%s463 + $0x8] sm:$0xff] %vm338, %v462
        %s466 = sadd.s32 %s383, 12
        %s467 = sld [smem:[#allocation2 + %s466]]
        %v468 = vstv %s467
        %v469 = vmul.f32 %v468, %v311
        %v470 = vmul.f32 %v468, %v297
        %s471 = sadd.s32 %s383, 13
        %s472 = sld [smem:[#allocation2 + %s471]]
        %v473 = vstv %s472
        %v474 = vmul.f32 %v473, %v260
        %v475 = vmul.f32 %v473, %v261
        %v476 = vadd.f32 %v469, %v474
        %v477 = vadd.f32 %v470, %v475
        %s478 = sadd.s32 %s383, 14
        %s479 = sld [smem:[#allocation2 + %s478]]
        %v480 = vstv %s479
        %v481 = vmul.f32 %v480, %v319
        %v482 = vmul.f32 %v480, %v336
        %v483 = vadd.f32 %v476, %v481
        %v484 = vadd.f32 %v477, %v482
        %s485 = sadd.s32 %s383, 15
        %s486 = sld [smem:[#allocation2 + %s485]]
        %v487 = vstv %s486
        %v488 = vmul.f32 %v487, %v378
        %v489 = vadd.f32 %v483, %v488
        %v490 = vadd.f32 %v484, %v488
        %s491 = sadd.s32 %s383, 16
        %s492 = sld [smem:[#allocation2 + %s491]]
        %v493 = vstv %s492
        %v494 = vmul.f32 %v493, %v260
        %v495 = vmul.f32 %v493, %v261
        %v496 = vadd.f32 %v489, %v494
        %v497 = vadd.f32 %v490, %v495
        %s498 = sadd.s32 %s383, 17
        %s499 = sld [smem:[#allocation2 + %s498]]
        %v500 = vstv %s499
        %v501 = vmul.f32 %v500, %v268
        %v502 = vmul.f32 %v500, %v269
        %v503 = vadd.f32 %v496, %v501
        %v504 = vadd.f32 %v497, %v502
        %s505 = scalar_lea.vmem %s232, 32 [#allocation5]
        %506 = vst.msk [vmem:[%s505] sm:$0xff] %vm338, %v503
        %507 = vst.msk [vmem:[%s505 + $0x8] sm:$0xff] %vm338, %v504
        %s508 = sadd.s32 %s383, 18
        %s509 = sld [smem:[#allocation2 + %s508]]
        %v510 = vstv %s509
        %v511 = vmul.f32 %v510, %v312
        %v512 = vmul.f32 %v510, %v300
        %s513 = sadd.s32 %s383, 19
        %s514 = sld [smem:[#allocation2 + %s513]]
        %v515 = vstv %s514
        %v516 = vmul.f32 %v515, %v262
        %v517 = vmul.f32 %v515, %v263
        %v518 = vadd.f32 %v511, %v516
        %v519 = vadd.f32 %v512, %v517
        %s520 = sadd.s32 %s383, 20
        %s521 = sld [smem:[#allocation2 + %s520]]
        %v522 = vstv %s521
        %v523 = vmul.f32 %v522, %v321
        %v524 = vmul.f32 %v522, %v337
        %v525 = vadd.f32 %v518, %v523
        %v526 = vadd.f32 %v519, %v524
        %s527 = sadd.s32 %s383, 21
        %s528 = sld [smem:[#allocation2 + %s527]]
        %v529 = vstv %s528
        %v530 = vmul.f32 %v529, %v379
        %v531 = vadd.f32 %v525, %v530
        %v532 = vadd.f32 %v526, %v530
        %s533 = sadd.s32 %s383, 22
        %s534 = sld [smem:[#allocation2 + %s533]]
        %v535 = vstv %s534
        %v536 = vmul.f32 %v535, %v262
        %v537 = vmul.f32 %v535, %v263
        %v538 = vadd.f32 %v531, %v536
        %v539 = vadd.f32 %v532, %v537
        %s540 = sadd.s32 %s383, 23
        %s541 = sld [smem:[#allocation2 + %s540]]
        %v542 = vstv %s541
        %v543 = vmul.f32 %v542, %v270
        %v544 = vmul.f32 %v542, %v271
        %v545 = vadd.f32 %v538, %v543
        %v546 = vadd.f32 %v539, %v544
        %s547 = scalar_lea.vmem %s232, 48 [#allocation5]
        %548 = vst.msk [vmem:[%s547] sm:$0xff] %vm338, %v545
        %549 = vst.msk [vmem:[%s547 + $0x8] sm:$0xff] %vm338, %v546
        %s550 = sand.u32 %s117, 1
        %s551 = scalar_lea.sflag [#allocation3], %s550
        %s552 = sand.u32 %s117, 1
        %s553 = smul.addr %s552, 64
        %s554 = scalar_lea.vmem [#allocation5], %s553
        // Predicated region
        $region37: #{cubic_attention.3} parent=31 // pred_check
          %p555 = pneg %p127
        $region38: #{cubic_attention.3} parent=31 // pred_check_branch
          %557 = sbr.rel (%p555) target = $region40
        $region39: #{cubic_attention.3} parent=31 // pred_region
          %s558 = smul.u32 4, %s23
          %s560 = ssub.s32 1024, 1024
          %561 = vsyncadd %s551, %s560
          %s562 = smul.addr %s558, 2
          %s563 = smul.addr %s22, 8
          %s564 = sadd.s32 %s562, %s563
          %s565 = smul.addr %s564, 128
          %s566 = scalar_lea.hbm %s3, %s565
          %s567 = sshll.u32 %s554, 4
          %s568 = int_to_ptr.vmem [resolvable:$true] %s567
          %573 = dma.vmem_to_hbm [thread:$0]  %s568, 1024, %s566, %s551, 128, 128, 8
        $region40: #{cubic_attention.3} parent=31 // pred_fallthru
          _
      $region32: #{cubic_attention.3} parent=5 // pred_fallthru
        _
      %p574 = scmp.le.s32.totalorder 2, %s13
      // Predicated region
      $region41: #{cubic_attention.3} parent=5 // pred_check
        %p575 = pneg %p574
      $region42: #{cubic_attention.3} parent=5 // pred_check_branch
        %577 = sbr.rel (%p575) target = $region44
      $region43: #{cubic_attention.3} parent=5 // pred_region
        %s578 = ssub.s32 %s13, 2
        // Predicated region
        $region45: #{cubic_attention.3} parent=43 // pred_check
          %p579 = pneg %p133
        $region46: #{cubic_attention.3} parent=43 // pred_check_branch
          %581 = sbr.rel (%p579) target = $region48
        $region47: #{cubic_attention.3} parent=43 // pred_region
          %s582 = sand.u32 %s118, 1
          %s583 = scalar_lea.sflag [#allocation3], %s582
          %s584 = sand.u32 %s118, 1
          %s585 = smul.addr %s584, 64
          %s586 = scalar_lea.vmem [#allocation5], %s585
          %587 = dma.done %s583, 1024
        $region48: #{cubic_attention.3} parent=43 // pred_fallthru
          _
      $region44: #{cubic_attention.3} parent=5 // pred_fallthru
        _
    $region6: #{cubic_attention.3} parent=1 // loop_footer
      %s17 = sadd.s32 1, %s13
    $region7: #{cubic_attention.3} parent=1 // loop_footer_branch
      %12 = sbr.rel target = $region3
    $region8: #{cubic_attention.3} parent=1 // loop_exit
      _
    %588 = vsyncpa [#allocation3], 1
    %s589 = scalar_lea.sflag [#allocation3], 1
    %590 = vsyncpa %s589, 1
    %591 = vsyncpa [#allocation4], 1
    %s592 = scalar_lea.sflag [#allocation4], 1
    %593 = vsyncpa %s592, 1

</llo_original>
